<compile_context>
chip_gen: v7x
topology: tpu7x:2x2x1
jax: 0.10.0
libtpu: 0.0.40
codegen_flags: <defaults>
</compile_context>

<pallas_src>
import jax
import jax.numpy as jnp
from jax.experimental import pallas as pl
from jax.experimental.pallas import tpu as pltpu

IN_FEATURES = 3 * 28 * 28   # 2352
HIDDEN = 100
OUT_FEATURES = 2

H_PAD = 128   # hidden padded to one full lane group
O_PAD = 8     # output padded to 8 lanes (real width is 2; sliced in the wrapper)


def _round_up(n, m):
    return ((n + m - 1) // m) * m


def _pad_axis(a, target, axis):
    pad = target - a.shape[axis]
    if pad <= 0:
        return a
    cfg = [(0, 0)] * a.ndim
    cfg[axis] = (0, pad)
    return jnp.pad(a, cfg)


def _device_defaults():
    """Returns (tile_b, vmem_limit_bytes) tuned per TPU generation."""
    try:
        kind = jax.devices()[0].device_kind.lower()
    except Exception:
        kind = ""
    if "v5" in kind or "v6" in kind:
        # 128 MiB physical VMEM: bigger tiles amortize per-step overhead.
        return 2048, 96 * 1024 * 1024
    # v7x (64 MiB physical VMEM) or unknown: stay conservative.
    return 1024, 48 * 1024 * 1024


def _discriminator_kernel(x_ref, w1_ref, b1_ref, w2_ref, b2_ref, o_ref):
    # ReverseLayerF forward is identity -> consume x as-is.
    # f32 x block straight from HBM; in-kernel cast to bf16 for the MXU
    # (VALU work fully hidden under the dominant x DMA).
    x = x_ref[...].astype(jnp.bfloat16)                                 # (tile_b, 2352)
    # Linear 1 + ReLU: bf16 operands, f32 accumulation; epilogue stays f32.
    h = jnp.dot(x, w1_ref[...], preferred_element_type=jnp.float32) + b1_ref[...]
    h = jnp.maximum(h, 0.0)                                             # padded hidden cols stay 0
    # Linear 2: tiny (128 x 8) f32 matmul, hidden under DMA; padded out cols are 0.
    out = jnp.dot(h, w2_ref[...], preferred_element_type=jnp.float32) + b2_ref[...]
    o_ref[...] = out


def discriminator_forward(x, alpha, params, tile_b=None):
    """x: (B, 2352) f32. alpha is unused in forward (gradient reversal is bwd-only)."""
    del alpha  # forward semantics of ReverseLayerF are identity
    # TODO(synk): wrap with jax.custom_vjp to reproduce ReverseLayerF's (-alpha * grad)
    # if this forward is ever differentiated.
    w1, b1, w2, b2 = params
    B = x.shape[0]

    default_tile, vmem_limit = _device_defaults()
    if tile_b is None:
        tile_b = default_tile
    # Batch tile: multiple of 8 sublanes; clamp for tiny batches. The last block
    # may be partial — its garbage rows never touch valid rows (per-row math)
    # and are masked on writeback.
    tile_b = _round_up(min(tile_b, _round_up(B, 8)), 8)
    grid = (pl.cdiv(B, tile_b),)

    # Weight/bias padding (one pass over <1 MiB, negligible):
    #   w1: hidden axis 100 -> 128 with zeros, cast to bf16 for the MXU.
    #   w2/b2: padded to (128, 8)/(1, 8). Zero pads keep padded hidden/output
    #   columns exactly 0; the real 2 output columns are sliced in the wrapper.
    w1_p = _pad_axis(w1.astype(jnp.bfloat16), H_PAD, 1)                 # (2352, 128) bf16
    b1_p = _pad_axis(b1.astype(jnp.float32), H_PAD, 1)                  # (1, 128)
    w2_p = _pad_axis(_pad_axis(w2.astype(jnp.float32), H_PAD, 0), O_PAD, 1)  # (128, 8)
    b2_p = _pad_axis(b2.astype(jnp.float32), O_PAD, 1)                  # (1, 8)

    weight_bytes = (IN_FEATURES * H_PAD * 2 + H_PAD * 4
                    + H_PAD * O_PAD * 4 + O_PAD * 4)
    cost = pl.CostEstimate(
        flops=2 * B * IN_FEATURES * H_PAD + 2 * B * H_PAD * O_PAD,
        bytes_accessed=B * IN_FEATURES * 4 + weight_bytes + B * O_PAD * 4,
        transcendentals=0,
    )

    def resident(shape):
        # Constant-index, VMEM-resident block; single-buffered (no re-fetch needed).
        return pl.BlockSpec(shape, lambda i: (0, 0), pipeline_mode=pl.Buffered(1))

    out_padded = pl.pallas_call(
        _discriminator_kernel,
        out_shape=jax.ShapeDtypeStruct((B, O_PAD), jnp.float32),
        grid=grid,
        in_specs=[
            # x: batch-tiled, full 2352-wide rows (block last dim == full array dim).
            pl.BlockSpec((tile_b, IN_FEATURES), lambda i: (i, 0)),
            resident((IN_FEATURES, H_PAD)),   # w1
            resident((1, H_PAD)),             # b1
            resident((H_PAD, O_PAD)),         # w2
            resident((1, O_PAD)),             # b2
        ],
        out_specs=pl.BlockSpec((tile_b, O_PAD), lambda i: (i, 0)),
        compiler_params=pltpu.CompilerParams(
            dimension_semantics=("parallel",),     # dual-TC sharding on v7x
            vmem_limit_bytes=vmem_limit,
        ),
        cost_estimate=cost,
    )(x, w1_p, b1_p, w2_p, b2_p)

    # Strip only the lane padding of the 2-wide output (no batch padding to strip).
    return out_padded[:, :OUT_FEATURES]


def init_params(key):
    """Deterministic init mimicking nn.Linear default (uniform +-1/sqrt(fan_in))."""
    k1, k2, k3, k4 = jax.random.split(key, 4)
    bound1 = 1.0 / jnp.sqrt(jnp.float32(IN_FEATURES))
    bound2 = 1.0 / jnp.sqrt(jnp.float32(HIDDEN))
    w1 = jax.random.uniform(k1, (IN_FEATURES, HIDDEN), jnp.float32, -bound1, bound1)
    b1 = jax.random.uniform(k2, (1, HIDDEN), jnp.float32, -bound1, bound1)
    w2 = jax.random.uniform(k3, (HIDDEN, OUT_FEATURES), jnp.float32, -bound2, bound2)
    b2 = jax.random.uniform(k4, (1, OUT_FEATURES), jnp.float32, -bound2, bound2)
    return w1, b1, w2, b2


if __name__ == "__main__":
    key = jax.random.PRNGKey(0)
    k_params, k_x = jax.random.split(key)

    params = init_params(k_params)

    B = 2
    x = jax.random.normal(k_x, (B, IN_FEATURES), jnp.float32)
    alpha = 0.5  # only matters for backward in the original module

    out = discriminator_forward(x, alpha, params)
    out = jax.block_until_ready(out)

    # Pure f32 reference (kernel uses bf16 layer-1 operands with f32 accumulation,
    # comfortably within the tolerance below).
    w1, b1, w2, b2 = params
    ref = jnp.maximum(x @ w1 + b1, 0.0) @ w2 + b2

    assert out.shape == (B, OUT_FEATURES)
    assert jnp.allclose(out, ref, atol=2e-2, rtol=2e-2), (out, ref)

    print("KERNEL_OK")
</pallas_src>

<mosaic_0001>
module attributes {stable_mosaic.version = 11 : i64} {
  func.func @_discriminator_kernel(%arg0: i32, %arg1: memref<8x2352xf32, #tpu.memory_space<vmem>>, %arg2: memref<2352x128xbf16, #tpu.memory_space<vmem>>, %arg3: memref<1x128xf32, #tpu.memory_space<vmem>>, %arg4: memref<128x8xf32, #tpu.memory_space<vmem>>, %arg5: memref<1x8xf32, #tpu.memory_space<vmem>>, %arg6: memref<8x8xf32, #tpu.memory_space<vmem>>) attributes {dimension_semantics = [#tpu.dimension_semantics<parallel>], iteration_bounds = array<i64: 1>, scalar_prefetch = 0 : i64, scratch_operands = 0 : i64, tpu.core_type = #tpu.core_type<tc>, window_params = [{transform_indices = @transform_0, window_bounds = array<i64: 8, 2352>}, {pipeline_mode = #tpu.pipeline_mode<synchronous>, transform_indices = @transform_1, window_bounds = array<i64: 2352, 128>}, {pipeline_mode = #tpu.pipeline_mode<synchronous>, transform_indices = @transform_2, window_bounds = array<i64: 1, 128>}, {pipeline_mode = #tpu.pipeline_mode<synchronous>, transform_indices = @transform_3, window_bounds = array<i64: 128, 8>}, {pipeline_mode = #tpu.pipeline_mode<synchronous>, transform_indices = @transform_4, window_bounds = array<i64: 1, 8>}, {transform_indices = @transform_5, window_bounds = array<i64: 8, 8>}]} {
    %c0 = arith.constant 0 : index
    %c0_0 = arith.constant 0 : index
    %0 = vector.load %arg1[%c0, %c0_0] : memref<8x2352xf32, #tpu.memory_space<vmem>>, vector<8x2352xf32>
    %1 = arith.truncf %0 : vector<8x2352xf32> to vector<8x2352xbf16>
    %c0_1 = arith.constant 0 : index
    %c0_2 = arith.constant 0 : index
    %2 = vector.load %arg2[%c0_1, %c0_2] : memref<2352x128xbf16, #tpu.memory_space<vmem>>, vector<2352x128xbf16>
    %cst = arith.constant dense<0.000000e+00> : vector<8x128xf32>
    %3 = tpu.matmul %1, %2, %cst {dimension_numbers = #tpu.dot_dimension_numbers<[1], [0], [0], [1], [0, 0, 1, 1], [], []>} : vector<8x2352xbf16>, vector<2352x128xbf16>, vector<8x128xf32> -> vector<8x128xf32>
    %c0_3 = arith.constant 0 : index
    %c0_4 = arith.constant 0 : index
    %4 = vector.load %arg3[%c0_3, %c0_4] : memref<1x128xf32, #tpu.memory_space<vmem>>, vector<1x128xf32>
    %5 = vector.broadcast %4 : vector<1x128xf32> to vector<8x128xf32>
    %6 = arith.addf %3, %5 : vector<8x128xf32>
    %cst_5 = arith.constant 0.000000e+00 : f32
    %7 = vector.broadcast %cst_5 : f32 to vector<8x128xf32>
    %8 = arith.maximumf %6, %7 : vector<8x128xf32>
    %c0_6 = arith.constant 0 : index
    %c0_7 = arith.constant 0 : index
    %9 = vector.load %arg4[%c0_6, %c0_7] : memref<128x8xf32, #tpu.memory_space<vmem>>, vector<128x8xf32>
    %cst_8 = arith.constant dense<0.000000e+00> : vector<8x8xf32>
    %10 = tpu.matmul %8, %9, %cst_8 {dimension_numbers = #tpu.dot_dimension_numbers<[1], [0], [0], [1], [0, 0, 1, 1], [], []>} : vector<8x128xf32>, vector<128x8xf32>, vector<8x8xf32> -> vector<8x8xf32>
    %c0_9 = arith.constant 0 : index
    %c0_10 = arith.constant 0 : index
    %11 = vector.load %arg5[%c0_9, %c0_10] : memref<1x8xf32, #tpu.memory_space<vmem>>, vector<1x8xf32>
    %12 = vector.broadcast %11 : vector<1x8xf32> to vector<8x8xf32>
    %13 = arith.addf %10, %12 : vector<8x8xf32>
    %c0_11 = arith.constant 0 : index
    %c0_12 = arith.constant 0 : index
    %14 = vector.load %arg6[%c0_11, %c0_12] : memref<8x8xf32, #tpu.memory_space<vmem>>, vector<8x8xf32>
    tpu.vector_store %arg6[%c0_11, %c0_12], %13 {strides = array<i32>} : memref<8x8xf32, #tpu.memory_space<vmem>>, vector<8x8xf32>,
    return
  }
  func.func @transform_0(%arg0: i32) -> (i32, i32) {
    %c0_i32 = arith.constant 0 : i32
    %c0_i32_0 = arith.constant 0 : i32
    return %arg0, %c0_i32 : i32, i32
  }
  func.func @transform_1(%arg0: i32) -> (i32, i32) {
    %c0_i32 = arith.constant 0 : i32
    %c0_i32_0 = arith.constant 0 : i32
    %c0_i32_1 = arith.constant 0 : i32
    return %c0_i32, %c0_i32_0 : i32, i32
  }
  func.func @transform_2(%arg0: i32) -> (i32, i32) {
    %c0_i32 = arith.constant 0 : i32
    %c0_i32_0 = arith.constant 0 : i32
    %c0_i32_1 = arith.constant 0 : i32
    return %c0_i32, %c0_i32_0 : i32, i32
  }
  func.func @transform_3(%arg0: i32) -> (i32, i32) {
    %c0_i32 = arith.constant 0 : i32
    %c0_i32_0 = arith.constant 0 : i32
    %c0_i32_1 = arith.constant 0 : i32
    return %c0_i32, %c0_i32_0 : i32, i32
  }
  func.func @transform_4(%arg0: i32) -> (i32, i32) {
    %c0_i32 = arith.constant 0 : i32
    %c0_i32_0 = arith.constant 0 : i32
    %c0_i32_1 = arith.constant 0 : i32
    return %c0_i32, %c0_i32_0 : i32, i32
  }
  func.func @transform_5(%arg0: i32) -> (i32, i32) {
    %c0_i32 = arith.constant 0 : i32
    %c0_i32_0 = arith.constant 0 : i32
    return %arg0, %c0_i32 : i32, i32
  }
}

</mosaic_0001>

<llo_original>
// kernel: tpu_custom_call.1
$region0: #{tpu_custom_call.1}
  #allocation0 [shape = 'u32[]', space=smem, size = 0x4, offset = 0x4, fixed_abs, tag = 'smem constant byte address 0x4 - core index']
  #allocation1 [shape = 'u32[144,128]{1,0:T(1,128)}', space=vmem, size = 0x12000, scoped, tag = 'internal scratch']
  %s0 = inlined_call_operand.vmem [shape: f32[2,2352], index: 0, kind: input, shape index: {}]
  %s1 = inlined_call_operand.hbm [shape: bf16[2352,128], index: 1, kind: input, shape index: {}]
  %s2 = inlined_call_operand.vmem [shape: f32[1,128], index: 2, kind: input, shape index: {}]
  %s3 = inlined_call_operand.vmem [shape: f32[128,8], index: 3, kind: input, shape index: {}]
  %s4 = inlined_call_operand.vmem [shape: f32[1,8], index: 4, kind: input, shape index: {}]
  %s5 = inlined_call_operand.hbm [shape: f32[2,8], index: 5, kind: output, shape index: {}]
  %s6 = sld [smem:[#allocation0]]
  $region34: #{tpu_custom_call.1} parent=0
    _
  %s8 = ssub.s32 1, %s6
  %s9 = scalar_select 0, %s8, %s6
  $region1: #{tpu_custom_call.1} parent=0
    #allocation2 [shape = 'u8[602112]{0}', space=vmem, size = 0x93000, scoped, tag = 'input window, operand 1, single buffered']
    #allocation3 [shape = 's32[1]{0}', space=sflag, size = 0x4, scoped, tag = 'scoped memory for tpu_custom_call.1']
    #allocation4 [shape = 's32[1]{0}', space=sflag, size = 0x4, scoped, tag = 'scoped memory for tpu_custom_call.1']
    #allocation5 [shape = 'u8[4096]{0}', space=vmem, size = 0x1000, scoped, tag = 'output window, operand 0, single buffered']
    %10 = vsyncpa [#allocation3], 0
    %11 = vsyncpa [#allocation4], 0
    // Predicated region
    $region2: #{tpu_custom_call.1} parent=1 // pred_check
      _
    $region3: #{tpu_custom_call.1} parent=1 // pred_check_branch
      %13 = sbr.rel (0) target = $region5
    $region4: #{tpu_custom_call.1} parent=1 // pred_region
      _
    $region5: #{tpu_custom_call.1} parent=1 // pred_fallthru
      _
    // Predicated region
    $region6: #{tpu_custom_call.1} parent=1 // pred_check
      _
    $region7: #{tpu_custom_call.1} parent=1 // pred_check_branch
      %15 = sbr.rel (0) target = $region9
    $region8: #{tpu_custom_call.1} parent=1 // pred_region
      %s17 = ssub.s32 18816, 18816
      %18 = vsyncadd [#allocation3], %s17
      %s19 = sshll.u32 [#allocation2], 4
      %s20 = int_to_ptr.vmem [resolvable:$true] %s19
      %25 = dma.hbm_to_vmem [thread:$0]  %s1, 18816, %s20, [#allocation3], 64, 64, 4
    $region9: #{tpu_custom_call.1} parent=1 // pred_fallthru
      _
    // Predicated region
    $region10: #{tpu_custom_call.1} parent=1 // pred_check
      _
    $region11: #{tpu_custom_call.1} parent=1 // pred_check_branch
      %27 = sbr.rel (0) target = $region13
    $region12: #{tpu_custom_call.1} parent=1 // pred_region
      _
    $region13: #{tpu_custom_call.1} parent=1 // pred_fallthru
      _
    // Predicated region
    $region14: #{tpu_custom_call.1} parent=1 // pred_check
      _
    $region15: #{tpu_custom_call.1} parent=1 // pred_check_branch
      %29 = sbr.rel (0) target = $region17
    $region16: #{tpu_custom_call.1} parent=1 // pred_region
      _
    $region17: #{tpu_custom_call.1} parent=1 // pred_fallthru
      _
    // Predicated region
    $region18: #{tpu_custom_call.1} parent=1 // pred_check
      _
    $region19: #{tpu_custom_call.1} parent=1 // pred_check_branch
      %31 = sbr.rel (0) target = $region21
    $region20: #{tpu_custom_call.1} parent=1 // pred_region
      _
    $region21: #{tpu_custom_call.1} parent=1 // pred_fallthru
      _
    // Predicated region
    $region22: #{tpu_custom_call.1} parent=1 // pred_check
      _
    $region23: #{tpu_custom_call.1} parent=1 // pred_check_branch
      %33 = sbr.rel (0) target = $region25
    $region24: #{tpu_custom_call.1} parent=1 // pred_region
      %34 = dma.done [#allocation3], 18816
    $region25: #{tpu_custom_call.1} parent=1 // pred_fallthru
      _
    %v36 = vld [vmem:[%s0] sm:$0xff]
    %v37 = vld [vmem:[%s0 + $0x8] sm:$0xff]
    %v38 = vld [vmem:[%s0 + $0x10] sm:$0xff]
    %v39 = vld [vmem:[%s0 + $0x18] sm:$0xff]
    %v40 = vld [vmem:[%s0 + $0x20] sm:$0x3f]
    %v41 = vld [vmem:[%s0 + $0x26] sm:$0xff]
    %v42 = vld [vmem:[%s0 + $0x2e] sm:$0xff]
    %v43 = vld [vmem:[%s0 + $0x36] sm:$0xff]
    %v44 = vld [vmem:[%s0 + $0x3e] sm:$0xff]
    %v45 = vld [vmem:[%s0 + $0x46] sm:$0x3f]
    %v46 = vld [vmem:[%s0 + $0x4c] sm:$0xff]
    %v47 = vld [vmem:[%s0 + $0x54] sm:$0xff]
    %v48 = vld [vmem:[%s0 + $0x5c] sm:$0xff]
    %v49 = vld [vmem:[%s0 + $0x64] sm:$0xff]
    %v50 = vld [vmem:[%s0 + $0x6c] sm:$0x3f]
    %v51 = vld [vmem:[%s0 + $0x72] sm:$0xff]
    %v52 = vld [vmem:[%s0 + $0x7a] sm:$0xff]
    %v53 = vld [vmem:[%s0 + $0x82] sm:$0xff]
    %v54 = vld [vmem:[%s0 + $0x8a] sm:$0xff]
    %v55 = vld [vmem:[%s0 + $0x92] sm:$0x3f]
    %v76 = vcombine.low %v36, %v41
    %v77 = vcombine.high %v36, %v41
    %v78 = vcombine.low %v46, %v51
    %v79 = vcombine.high %v46, %v51
    %v81 = vunpack.c.l.s4 1983009808
    %v82 = vunpack.c.0.s8 %v81
    %v83 = vlaneseq
    %v84 = vshrl.u32 %v83, 7
    %v85 = vsub.s32 %v82, %v84
    %v86 = vrot.slane %v76, %v85
    %v88 = vunpack.c.l.s4 1983009808
    %v89 = vunpack.c.0.s8 %v88
    %v90 = vlaneseq
    %v91 = vshrl.u32 %v90, 7
    %v92 = vsub.s32 %v89, %v91
    %v93 = vrot.slane %v77, %v92
    %v95 = vunpack.c.l.s4 1983009808
    %v96 = vunpack.c.0.s8 %v95
    %v97 = vlaneseq
    %v98 = vshrl.u32 %v97, 7
    %v99 = vsub.s32 %v96, %v98
    %v100 = vrot.slane %v78, %v99
    %v102 = vunpack.c.l.s4 1983009808
    %v103 = vunpack.c.0.s8 %v102
    %v104 = vlaneseq
    %v105 = vshrl.u32 %v104, 7
    %v106 = vsub.s32 %v103, %v105
    %v107 = vrot.slane %v79, %v106
    %v108 = vcombine.low %v86, %v100
    %v109 = vcombine.high %v86, %v100
    %v110 = vcombine.low %v93, %v107
    %v111 = vcombine.high %v93, %v107
    %v112 = vcombine.low %v37, %v42
    %v113 = vcombine.high %v37, %v42
    %v114 = vcombine.low %v47, %v52
    %v115 = vcombine.high %v47, %v52
    %v117 = vunpack.c.l.s4 1983009808
    %v118 = vunpack.c.0.s8 %v117
    %v119 = vlaneseq
    %v120 = vshrl.u32 %v119, 7
    %v121 = vsub.s32 %v118, %v120
    %v122 = vrot.slane %v112, %v121
    %v124 = vunpack.c.l.s4 1983009808
    %v125 = vunpack.c.0.s8 %v124
    %v126 = vlaneseq
    %v127 = vshrl.u32 %v126, 7
    %v128 = vsub.s32 %v125, %v127
    %v129 = vrot.slane %v113, %v128
    %v131 = vunpack.c.l.s4 1983009808
    %v132 = vunpack.c.0.s8 %v131
    %v133 = vlaneseq
    %v134 = vshrl.u32 %v133, 7
    %v135 = vsub.s32 %v132, %v134
    %v136 = vrot.slane %v114, %v135
    %v138 = vunpack.c.l.s4 1983009808
    %v139 = vunpack.c.0.s8 %v138
    %v140 = vlaneseq
    %v141 = vshrl.u32 %v140, 7
    %v142 = vsub.s32 %v139, %v141
    %v143 = vrot.slane %v115, %v142
    %v144 = vcombine.low %v122, %v136
    %v145 = vcombine.high %v122, %v136
    %v146 = vcombine.low %v129, %v143
    %v147 = vcombine.high %v129, %v143
    %v148 = vcombine.low %v38, %v43
    %v149 = vcombine.high %v38, %v43
    %v150 = vcombine.low %v48, %v53
    %v151 = vcombine.high %v48, %v53
    %v153 = vunpack.c.l.s4 1983009808
    %v154 = vunpack.c.0.s8 %v153
    %v155 = vlaneseq
    %v156 = vshrl.u32 %v155, 7
    %v157 = vsub.s32 %v154, %v156
    %v158 = vrot.slane %v148, %v157
    %v160 = vunpack.c.l.s4 1983009808
    %v161 = vunpack.c.0.s8 %v160
    %v162 = vlaneseq
    %v163 = vshrl.u32 %v162, 7
    %v164 = vsub.s32 %v161, %v163
    %v165 = vrot.slane %v149, %v164
    %v167 = vunpack.c.l.s4 1983009808
    %v168 = vunpack.c.0.s8 %v167
    %v169 = vlaneseq
    %v170 = vshrl.u32 %v169, 7
    %v171 = vsub.s32 %v168, %v170
    %v172 = vrot.slane %v150, %v171
    %v174 = vunpack.c.l.s4 1983009808
    %v175 = vunpack.c.0.s8 %v174
    %v176 = vlaneseq
    %v177 = vshrl.u32 %v176, 7
    %v178 = vsub.s32 %v175, %v177
    %v179 = vrot.slane %v151, %v178
    %v180 = vcombine.low %v158, %v172
    %v181 = vcombine.high %v158, %v172
    %v182 = vcombine.low %v165, %v179
    %v183 = vcombine.high %v165, %v179
    %v184 = vcombine.low %v39, %v44
    %v185 = vcombine.high %v39, %v44
    %v186 = vcombine.low %v49, %v54
    %v187 = vcombine.high %v49, %v54
    %v189 = vunpack.c.l.s4 1983009808
    %v190 = vunpack.c.0.s8 %v189
    %v191 = vlaneseq
    %v192 = vshrl.u32 %v191, 7
    %v193 = vsub.s32 %v190, %v192
    %v194 = vrot.slane %v184, %v193
    %v196 = vunpack.c.l.s4 1983009808
    %v197 = vunpack.c.0.s8 %v196
    %v198 = vlaneseq
    %v199 = vshrl.u32 %v198, 7
    %v200 = vsub.s32 %v197, %v199
    %v201 = vrot.slane %v185, %v200
    %v203 = vunpack.c.l.s4 1983009808
    %v204 = vunpack.c.0.s8 %v203
    %v205 = vlaneseq
    %v206 = vshrl.u32 %v205, 7
    %v207 = vsub.s32 %v204, %v206
    %v208 = vrot.slane %v186, %v207
    %v210 = vunpack.c.l.s4 1983009808
    %v211 = vunpack.c.0.s8 %v210
    %v212 = vlaneseq
    %v213 = vshrl.u32 %v212, 7
    %v214 = vsub.s32 %v211, %v213
    %v215 = vrot.slane %v187, %v214
    %v216 = vcombine.low %v194, %v208
    %v217 = vcombine.high %v194, %v208
    %v218 = vcombine.low %v201, %v215
    %v219 = vcombine.high %v201, %v215
    %v220 = vcombine.low %v40, %v45
    %v221 = vcombine.high %v40, %v45
    %v222 = vcombine.low %v50, %v55
    %v223 = vcombine.high %v50, %v55
    %v225 = vunpack.c.l.s4 1983009808
    %v226 = vunpack.c.0.s8 %v225
    %v227 = vlaneseq
    %v228 = vshrl.u32 %v227, 7
    %v229 = vsub.s32 %v226, %v228
    %v230 = vrot.slane %v220, %v229
    %v232 = vunpack.c.l.s4 1983009808
    %v233 = vunpack.c.0.s8 %v232
    %v234 = vlaneseq
    %v235 = vshrl.u32 %v234, 7
    %v236 = vsub.s32 %v233, %v235
    %v237 = vrot.slane %v221, %v236
    %v239 = vunpack.c.l.s4 1983009808
    %v240 = vunpack.c.0.s8 %v239
    %v241 = vlaneseq
    %v242 = vshrl.u32 %v241, 7
    %v243 = vsub.s32 %v240, %v242
    %v244 = vrot.slane %v222, %v243
    %v246 = vunpack.c.l.s4 1983009808
    %v247 = vunpack.c.0.s8 %v246
    %v248 = vlaneseq
    %v249 = vshrl.u32 %v248, 7
    %v250 = vsub.s32 %v247, %v249
    %v251 = vrot.slane %v223, %v250
    %v252 = vcombine.low %v230, %v244
    %v253 = vcombine.high %v230, %v244
    %v254 = vcombine.low %v237, %v251
    %v274 = vpack.c.bf16 %v108, %v108
    %v275 = vpack.c.bf16 %v109, %v109
    %v276 = vpack.c.bf16 %v110, %v110
    %v277 = vpack.c.bf16 %v111, %v111
    %v278 = vpack.c.bf16 %v144, %v144
    %v279 = vpack.c.bf16 %v145, %v145
    %v280 = vpack.c.bf16 %v146, %v146
    %v281 = vpack.c.bf16 %v147, %v147
    %v282 = vpack.c.bf16 %v180, %v180
    %v283 = vpack.c.bf16 %v181, %v181
    %v284 = vpack.c.bf16 %v182, %v182
    %v285 = vpack.c.bf16 %v183, %v183
    %v286 = vpack.c.bf16 %v216, %v216
    %v287 = vpack.c.bf16 %v217, %v217
    %v288 = vpack.c.bf16 %v218, %v218
    %v289 = vpack.c.bf16 %v219, %v219
    %v290 = vpack.c.bf16 %v252, %v252
    %v291 = vpack.c.bf16 %v253, %v253
    %v292 = vpack.c.bf16 %v254, %v254
    %v293 = vld [vmem:[#allocation2] sm:$0xf]
    %v294 = vld [vmem:[#allocation2 + $0x4] sm:$0xf]
    %v295 = vld [vmem:[#allocation2 + $0x8] sm:$0xf]
    %v296 = vld [vmem:[#allocation2 + $0xc] sm:$0xf]
    %v297 = vld [vmem:[#allocation2 + $0x10] sm:$0xf]
    %v298 = vld [vmem:[#allocation2 + $0x14] sm:$0xf]
    %v299 = vld [vmem:[#allocation2 + $0x18] sm:$0xf]
    %v300 = vld [vmem:[#allocation2 + $0x1c] sm:$0xf]
    %v301 = vld [vmem:[#allocation2 + $0x20] sm:$0xf]
    %v302 = vld [vmem:[#allocation2 + $0x24] sm:$0xf]
    %v303 = vld [vmem:[#allocation2 + $0x28] sm:$0xf]
    %v304 = vld [vmem:[#allocation2 + $0x2c] sm:$0xf]
    %v305 = vld [vmem:[#allocation2 + $0x30] sm:$0xf]
    %v306 = vld [vmem:[#allocation2 + $0x34] sm:$0xf]
    %v307 = vld [vmem:[#allocation2 + $0x38] sm:$0xf]
    %v308 = vld [vmem:[#allocation2 + $0x3c] sm:$0xf]
    %v309 = vld [vmem:[#allocation2 + $0x40] sm:$0xf]
    %v310 = vld [vmem:[#allocation2 + $0x44] sm:$0xf]
    %v311 = vld [vmem:[#allocation2 + $0x48] sm:$0xf]
    %v312 = vld [vmem:[#allocation2 + $0x4c] sm:$0xf]
    %v313 = vld [vmem:[#allocation2 + $0x50] sm:$0xf]
    %v314 = vld [vmem:[#allocation2 + $0x54] sm:$0xf]
    %v315 = vld [vmem:[#allocation2 + $0x58] sm:$0xf]
    %v316 = vld [vmem:[#allocation2 + $0x5c] sm:$0xf]
    %v317 = vld [vmem:[#allocation2 + $0x60] sm:$0xf]
    %v318 = vld [vmem:[#allocation2 + $0x64] sm:$0xf]
    %v319 = vld [vmem:[#allocation2 + $0x68] sm:$0xf]
    %v320 = vld [vmem:[#allocation2 + $0x6c] sm:$0xf]
    %v321 = vld [vmem:[#allocation2 + $0x70] sm:$0xf]
    %v322 = vld [vmem:[#allocation2 + $0x74] sm:$0xf]
    %v323 = vld [vmem:[#allocation2 + $0x78] sm:$0xf]
    %v324 = vld [vmem:[#allocation2 + $0x7c] sm:$0xf]
    %v325 = vld [vmem:[#allocation2 + $0x80] sm:$0xf]
    %v326 = vld [vmem:[#allocation2 + $0x84] sm:$0xf]
    %v327 = vld [vmem:[#allocation2 + $0x88] sm:$0xf]
    %v328 = vld [vmem:[#allocation2 + $0x8c] sm:$0xf]
    %v329 = vld [vmem:[#allocation2 + $0x90] sm:$0xf]
    %v330 = vld [vmem:[#allocation2 + $0x94] sm:$0xf]
    %v331 = vld [vmem:[#allocation2 + $0x98] sm:$0xf]
    %v332 = vld [vmem:[#allocation2 + $0x9c] sm:$0xf]
    %v333 = vld [vmem:[#allocation2 + $0xa0] sm:$0xf]
    %v334 = vld [vmem:[#allocation2 + $0xa4] sm:$0xf]
    %v335 = vld [vmem:[#allocation2 + $0xa8] sm:$0xf]
    %v336 = vld [vmem:[#allocation2 + $0xac] sm:$0xf]
    %v337 = vld [vmem:[#allocation2 + $0xb0] sm:$0xf]
    %v338 = vld [vmem:[#allocation2 + $0xb4] sm:$0xf]
    %v339 = vld [vmem:[#allocation2 + $0xb8] sm:$0xf]
    %v340 = vld [vmem:[#allocation2 + $0xbc] sm:$0xf]
    %v341 = vld [vmem:[#allocation2 + $0xc0] sm:$0xf]
    %v342 = vld [vmem:[#allocation2 + $0xc4] sm:$0xf]
    %v343 = vld [vmem:[#allocation2 + $0xc8] sm:$0xf]
    %v344 = vld [vmem:[#allocation2 + $0xcc] sm:$0xf]
    %v345 = vld [vmem:[#allocation2 + $0xd0] sm:$0xf]
    %v346 = vld [vmem:[#allocation2 + $0xd4] sm:$0xf]
    %v347 = vld [vmem:[#allocation2 + $0xd8] sm:$0xf]
    %v348 = vld [vmem:[#allocation2 + $0xdc] sm:$0xf]
    %v349 = vld [vmem:[#allocation2 + $0xe0] sm:$0xf]
    %v350 = vld [vmem:[#allocation2 + $0xe4] sm:$0xf]
    %v351 = vld [vmem:[#allocation2 + $0xe8] sm:$0xf]
    %v352 = vld [vmem:[#allocation2 + $0xec] sm:$0xf]
    %v353 = vld [vmem:[#allocation2 + $0xf0] sm:$0xf]
    %v354 = vld [vmem:[#allocation2 + $0xf4] sm:$0xf]
    %v355 = vld [vmem:[#allocation2 + $0xf8] sm:$0xf]
    %v356 = vld [vmem:[#allocation2 + $0xfc] sm:$0xf]
    %v357 = vld [vmem:[#allocation2 + $0x100] sm:$0xf]
    %v358 = vld [vmem:[#allocation2 + $0x104] sm:$0xf]
    %v359 = vld [vmem:[#allocation2 + $0x108] sm:$0xf]
    %v360 = vld [vmem:[#allocation2 + $0x10c] sm:$0xf]
    %v361 = vld [vmem:[#allocation2 + $0x110] sm:$0xf]
    %v362 = vld [vmem:[#allocation2 + $0x114] sm:$0xf]
    %v363 = vld [vmem:[#allocation2 + $0x118] sm:$0xf]
    %v364 = vld [vmem:[#allocation2 + $0x11c] sm:$0xf]
    %v365 = vld [vmem:[#allocation2 + $0x120] sm:$0xf]
    %v366 = vld [vmem:[#allocation2 + $0x124] sm:$0xf]
    %v367 = vld [vmem:[#allocation2 + $0x128] sm:$0xf]
    %v368 = vld [vmem:[#allocation2 + $0x12c] sm:$0xf]
    %v369 = vld [vmem:[#allocation2 + $0x130] sm:$0xf]
    %v370 = vld [vmem:[#allocation2 + $0x134] sm:$0xf]
    %v371 = vld [vmem:[#allocation2 + $0x138] sm:$0xf]
    %v372 = vld [vmem:[#allocation2 + $0x13c] sm:$0xf]
    %v373 = vld [vmem:[#allocation2 + $0x140] sm:$0xf]
    %v374 = vld [vmem:[#allocation2 + $0x144] sm:$0xf]
    %v375 = vld [vmem:[#allocation2 + $0x148] sm:$0xf]
    %v376 = vld [vmem:[#allocation2 + $0x14c] sm:$0xf]
    %v377 = vld [vmem:[#allocation2 + $0x150] sm:$0xf]
    %v378 = vld [vmem:[#allocation2 + $0x154] sm:$0xf]
    %v379 = vld [vmem:[#allocation2 + $0x158] sm:$0xf]
    %v380 = vld [vmem:[#allocation2 + $0x15c] sm:$0xf]
    %v381 = vld [vmem:[#allocation2 + $0x160] sm:$0xf]
    %v382 = vld [vmem:[#allocation2 + $0x164] sm:$0xf]
    %v383 = vld [vmem:[#allocation2 + $0x168] sm:$0xf]
    %v384 = vld [vmem:[#allocation2 + $0x16c] sm:$0xf]
    %v385 = vld [vmem:[#allocation2 + $0x170] sm:$0xf]
    %v386 = vld [vmem:[#allocation2 + $0x174] sm:$0xf]
    %v387 = vld [vmem:[#allocation2 + $0x178] sm:$0xf]
    %v388 = vld [vmem:[#allocation2 + $0x17c] sm:$0xf]
    %v389 = vld [vmem:[#allocation2 + $0x180] sm:$0xf]
    %v390 = vld [vmem:[#allocation2 + $0x184] sm:$0xf]
    %v391 = vld [vmem:[#allocation2 + $0x188] sm:$0xf]
    %v392 = vld [vmem:[#allocation2 + $0x18c] sm:$0xf]
    %v393 = vld [vmem:[#allocation2 + $0x190] sm:$0xf]
    %v394 = vld [vmem:[#allocation2 + $0x194] sm:$0xf]
    %v395 = vld [vmem:[#allocation2 + $0x198] sm:$0xf]
    %v396 = vld [vmem:[#allocation2 + $0x19c] sm:$0xf]
    %v397 = vld [vmem:[#allocation2 + $0x1a0] sm:$0xf]
    %v398 = vld [vmem:[#allocation2 + $0x1a4] sm:$0xf]
    %v399 = vld [vmem:[#allocation2 + $0x1a8] sm:$0xf]
    %v400 = vld [vmem:[#allocation2 + $0x1ac] sm:$0xf]
    %v401 = vld [vmem:[#allocation2 + $0x1b0] sm:$0xf]
    %v402 = vld [vmem:[#allocation2 + $0x1b4] sm:$0xf]
    %v403 = vld [vmem:[#allocation2 + $0x1b8] sm:$0xf]
    %v404 = vld [vmem:[#allocation2 + $0x1bc] sm:$0xf]
    %v405 = vld [vmem:[#allocation2 + $0x1c0] sm:$0xf]
    %v406 = vld [vmem:[#allocation2 + $0x1c4] sm:$0xf]
    %v407 = vld [vmem:[#allocation2 + $0x1c8] sm:$0xf]
    %v408 = vld [vmem:[#allocation2 + $0x1cc] sm:$0xf]
    %v409 = vld [vmem:[#allocation2 + $0x1d0] sm:$0xf]
    %v410 = vld [vmem:[#allocation2 + $0x1d4] sm:$0xf]
    %v411 = vld [vmem:[#allocation2 + $0x1d8] sm:$0xf]
    %v412 = vld [vmem:[#allocation2 + $0x1dc] sm:$0xf]
    %v413 = vld [vmem:[#allocation2 + $0x1e0] sm:$0xf]
    %v414 = vld [vmem:[#allocation2 + $0x1e4] sm:$0xf]
    %v415 = vld [vmem:[#allocation2 + $0x1e8] sm:$0xf]
    %v416 = vld [vmem:[#allocation2 + $0x1ec] sm:$0xf]
    %v417 = vld [vmem:[#allocation2 + $0x1f0] sm:$0xf]
    %v418 = vld [vmem:[#allocation2 + $0x1f4] sm:$0xf]
    %v419 = vld [vmem:[#allocation2 + $0x1f8] sm:$0xf]
    %v420 = vld [vmem:[#allocation2 + $0x1fc] sm:$0xf]
    %v421 = vld [vmem:[#allocation2 + $0x200] sm:$0xf]
    %v422 = vld [vmem:[#allocation2 + $0x204] sm:$0xf]
    %v423 = vld [vmem:[#allocation2 + $0x208] sm:$0xf]
    %v424 = vld [vmem:[#allocation2 + $0x20c] sm:$0xf]
    %v425 = vld [vmem:[#allocation2 + $0x210] sm:$0xf]
    %v426 = vld [vmem:[#allocation2 + $0x214] sm:$0xf]
    %v427 = vld [vmem:[#allocation2 + $0x218] sm:$0xf]
    %v428 = vld [vmem:[#allocation2 + $0x21c] sm:$0xf]
    %v429 = vld [vmem:[#allocation2 + $0x220] sm:$0xf]
    %v430 = vld [vmem:[#allocation2 + $0x224] sm:$0xf]
    %v431 = vld [vmem:[#allocation2 + $0x228] sm:$0xf]
    %v432 = vld [vmem:[#allocation2 + $0x22c] sm:$0xf]
    %v433 = vld [vmem:[#allocation2 + $0x230] sm:$0xf]
    %v434 = vld [vmem:[#allocation2 + $0x234] sm:$0xf]
    %v435 = vld [vmem:[#allocation2 + $0x238] sm:$0xf]
    %v436 = vld [vmem:[#allocation2 + $0x23c] sm:$0xf]
    %v437 = vld [vmem:[#allocation2 + $0x240] sm:$0xf]
    %v438 = vld [vmem:[#allocation2 + $0x244] sm:$0xf]
    %v439 = vld [vmem:[#allocation2 + $0x248] sm:$0xf]
    %v440 = vld [vmem:[#allocation2 + $0x24c] sm:$0xf]
    %v441 = vld [vmem:[#allocation2 + $0x250] sm:$0xf]
    %v442 = vld [vmem:[#allocation2 + $0x254] sm:$0xf]
    %v443 = vld [vmem:[#allocation2 + $0x258] sm:$0xf]
    %v444 = vld [vmem:[#allocation2 + $0x25c] sm:$0xf]
    %v445 = vld [vmem:[#allocation2 + $0x260] sm:$0xf]
    %v446 = vld [vmem:[#allocation2 + $0x264] sm:$0xf]
    %v447 = vld [vmem:[#allocation2 + $0x268] sm:$0xf]
    %v448 = vld [vmem:[#allocation2 + $0x26c] sm:$0xf]
    %v449 = vld [vmem:[#allocation2 + $0x270] sm:$0xf]
    %v450 = vld [vmem:[#allocation2 + $0x274] sm:$0xf]
    %v451 = vld [vmem:[#allocation2 + $0x278] sm:$0xf]
    %v452 = vld [vmem:[#allocation2 + $0x27c] sm:$0xf]
    %v453 = vld [vmem:[#allocation2 + $0x280] sm:$0xf]
    %v454 = vld [vmem:[#allocation2 + $0x284] sm:$0xf]
    %v455 = vld [vmem:[#allocation2 + $0x288] sm:$0xf]
    %v456 = vld [vmem:[#allocation2 + $0x28c] sm:$0xf]
    %v457 = vld [vmem:[#allocation2 + $0x290] sm:$0xf]
    %v458 = vld [vmem:[#allocation2 + $0x294] sm:$0xf]
    %v459 = vld [vmem:[#allocation2 + $0x298] sm:$0xf]
    %v460 = vld [vmem:[#allocation2 + $0x29c] sm:$0xf]
    %v461 = vld [vmem:[#allocation2 + $0x2a0] sm:$0xf]
    %v462 = vld [vmem:[#allocation2 + $0x2a4] sm:$0xf]
    %v463 = vld [vmem:[#allocation2 + $0x2a8] sm:$0xf]
    %v464 = vld [vmem:[#allocation2 + $0x2ac] sm:$0xf]
    %v465 = vld [vmem:[#allocation2 + $0x2b0] sm:$0xf]
    %v466 = vld [vmem:[#allocation2 + $0x2b4] sm:$0xf]
    %v467 = vld [vmem:[#allocation2 + $0x2b8] sm:$0xf]
    %v468 = vld [vmem:[#allocation2 + $0x2bc] sm:$0xf]
    %v469 = vld [vmem:[#allocation2 + $0x2c0] sm:$0xf]
    %v470 = vld [vmem:[#allocation2 + $0x2c4] sm:$0xf]
    %v471 = vld [vmem:[#allocation2 + $0x2c8] sm:$0xf]
    %v472 = vld [vmem:[#allocation2 + $0x2cc] sm:$0xf]
    %v473 = vld [vmem:[#allocation2 + $0x2d0] sm:$0xf]
    %v474 = vld [vmem:[#allocation2 + $0x2d4] sm:$0xf]
    %v475 = vld [vmem:[#allocation2 + $0x2d8] sm:$0xf]
    %v476 = vld [vmem:[#allocation2 + $0x2dc] sm:$0xf]
    %v477 = vld [vmem:[#allocation2 + $0x2e0] sm:$0xf]
    %v478 = vld [vmem:[#allocation2 + $0x2e4] sm:$0xf]
    %v479 = vld [vmem:[#allocation2 + $0x2e8] sm:$0xf]
    %v480 = vld [vmem:[#allocation2 + $0x2ec] sm:$0xf]
    %v481 = vld [vmem:[#allocation2 + $0x2f0] sm:$0xf]
    %v482 = vld [vmem:[#allocation2 + $0x2f4] sm:$0xf]
    %v483 = vld [vmem:[#allocation2 + $0x2f8] sm:$0xf]
    %v484 = vld [vmem:[#allocation2 + $0x2fc] sm:$0xf]
    %v485 = vld [vmem:[#allocation2 + $0x300] sm:$0xf]
    %v486 = vld [vmem:[#allocation2 + $0x304] sm:$0xf]
    %v487 = vld [vmem:[#allocation2 + $0x308] sm:$0xf]
    %v488 = vld [vmem:[#allocation2 + $0x30c] sm:$0xf]
    %v489 = vld [vmem:[#allocation2 + $0x310] sm:$0xf]
    %v490 = vld [vmem:[#allocation2 + $0x314] sm:$0xf]
    %v491 = vld [vmem:[#allocation2 + $0x318] sm:$0xf]
    %v492 = vld [vmem:[#allocation2 + $0x31c] sm:$0xf]
    %v493 = vld [vmem:[#allocation2 + $0x320] sm:$0xf]
    %v494 = vld [vmem:[#allocation2 + $0x324] sm:$0xf]
    %v495 = vld [vmem:[#allocation2 + $0x328] sm:$0xf]
    %v496 = vld [vmem:[#allocation2 + $0x32c] sm:$0xf]
    %v497 = vld [vmem:[#allocation2 + $0x330] sm:$0xf]
    %v498 = vld [vmem:[#allocation2 + $0x334] sm:$0xf]
    %v499 = vld [vmem:[#allocation2 + $0x338] sm:$0xf]
    %v500 = vld [vmem:[#allocation2 + $0x33c] sm:$0xf]
    %v501 = vld [vmem:[#allocation2 + $0x340] sm:$0xf]
    %v502 = vld [vmem:[#allocation2 + $0x344] sm:$0xf]
    %v503 = vld [vmem:[#allocation2 + $0x348] sm:$0xf]
    %v504 = vld [vmem:[#allocation2 + $0x34c] sm:$0xf]
    %v505 = vld [vmem:[#allocation2 + $0x350] sm:$0xf]
    %v506 = vld [vmem:[#allocation2 + $0x354] sm:$0xf]
    %v507 = vld [vmem:[#allocation2 + $0x358] sm:$0xf]
    %v508 = vld [vmem:[#allocation2 + $0x35c] sm:$0xf]
    %v509 = vld [vmem:[#allocation2 + $0x360] sm:$0xf]
    %v510 = vld [vmem:[#allocation2 + $0x364] sm:$0xf]
    %v511 = vld [vmem:[#allocation2 + $0x368] sm:$0xf]
    %v512 = vld [vmem:[#allocation2 + $0x36c] sm:$0xf]
    %v513 = vld [vmem:[#allocation2 + $0x370] sm:$0xf]
    %v514 = vld [vmem:[#allocation2 + $0x374] sm:$0xf]
    %v515 = vld [vmem:[#allocation2 + $0x378] sm:$0xf]
    %v516 = vld [vmem:[#allocation2 + $0x37c] sm:$0xf]
    %v517 = vld [vmem:[#allocation2 + $0x380] sm:$0xf]
    %v518 = vld [vmem:[#allocation2 + $0x384] sm:$0xf]
    %v519 = vld [vmem:[#allocation2 + $0x388] sm:$0xf]
    %v520 = vld [vmem:[#allocation2 + $0x38c] sm:$0xf]
    %v521 = vld [vmem:[#allocation2 + $0x390] sm:$0xf]
    %v522 = vld [vmem:[#allocation2 + $0x394] sm:$0xf]
    %v523 = vld [vmem:[#allocation2 + $0x398] sm:$0xf]
    %v524 = vld [vmem:[#allocation2 + $0x39c] sm:$0xf]
    %v525 = vld [vmem:[#allocation2 + $0x3a0] sm:$0xf]
    %v526 = vld [vmem:[#allocation2 + $0x3a4] sm:$0xf]
    %v527 = vld [vmem:[#allocation2 + $0x3a8] sm:$0xf]
    %v528 = vld [vmem:[#allocation2 + $0x3ac] sm:$0xf]
    %v529 = vld [vmem:[#allocation2 + $0x3b0] sm:$0xf]
    %v530 = vld [vmem:[#allocation2 + $0x3b4] sm:$0xf]
    %v531 = vld [vmem:[#allocation2 + $0x3b8] sm:$0xf]
    %v532 = vld [vmem:[#allocation2 + $0x3bc] sm:$0xf]
    %v533 = vld [vmem:[#allocation2 + $0x3c0] sm:$0xf]
    %v534 = vld [vmem:[#allocation2 + $0x3c4] sm:$0xf]
    %v535 = vld [vmem:[#allocation2 + $0x3c8] sm:$0xf]
    %v536 = vld [vmem:[#allocation2 + $0x3cc] sm:$0xf]
    %v537 = vld [vmem:[#allocation2 + $0x3d0] sm:$0xf]
    %v538 = vld [vmem:[#allocation2 + $0x3d4] sm:$0xf]
    %v539 = vld [vmem:[#allocation2 + $0x3d8] sm:$0xf]
    %v540 = vld [vmem:[#allocation2 + $0x3dc] sm:$0xf]
    %v541 = vld [vmem:[#allocation2 + $0x3e0] sm:$0xf]
    %v542 = vld [vmem:[#allocation2 + $0x3e4] sm:$0xf]
    %v543 = vld [vmem:[#allocation2 + $0x3e8] sm:$0xf]
    %v544 = vld [vmem:[#allocation2 + $0x3ec] sm:$0xf]
    %v545 = vld [vmem:[#allocation2 + $0x3f0] sm:$0xf]
    %v546 = vld [vmem:[#allocation2 + $0x3f4] sm:$0xf]
    %v547 = vld [vmem:[#allocation2 + $0x3f8] sm:$0xf]
    %v548 = vld [vmem:[#allocation2 + $0x3fc] sm:$0xf]
    %v549 = vld [vmem:[#allocation2 + $0x400] sm:$0xf]
    %v550 = vld [vmem:[#allocation2 + $0x404] sm:$0xf]
    %v551 = vld [vmem:[#allocation2 + $0x408] sm:$0xf]
    %v552 = vld [vmem:[#allocation2 + $0x40c] sm:$0xf]
    %v553 = vld [vmem:[#allocation2 + $0x410] sm:$0xf]
    %v554 = vld [vmem:[#allocation2 + $0x414] sm:$0xf]
    %v555 = vld [vmem:[#allocation2 + $0x418] sm:$0xf]
    %v556 = vld [vmem:[#allocation2 + $0x41c] sm:$0xf]
    %v557 = vld [vmem:[#allocation2 + $0x420] sm:$0xf]
    %v558 = vld [vmem:[#allocation2 + $0x424] sm:$0xf]
    %v559 = vld [vmem:[#allocation2 + $0x428] sm:$0xf]
    %v560 = vld [vmem:[#allocation2 + $0x42c] sm:$0xf]
    %v561 = vld [vmem:[#allocation2 + $0x430] sm:$0xf]
    %v562 = vld [vmem:[#allocation2 + $0x434] sm:$0xf]
    %v563 = vld [vmem:[#allocation2 + $0x438] sm:$0xf]
    %v564 = vld [vmem:[#allocation2 + $0x43c] sm:$0xf]
    %v565 = vld [vmem:[#allocation2 + $0x440] sm:$0xf]
    %v566 = vld [vmem:[#allocation2 + $0x444] sm:$0xf]
    %v567 = vld [vmem:[#allocation2 + $0x448] sm:$0xf]
    %v568 = vld [vmem:[#allocation2 + $0x44c] sm:$0xf]
    %v569 = vld [vmem:[#allocation2 + $0x450] sm:$0xf]
    %v570 = vld [vmem:[#allocation2 + $0x454] sm:$0xf]
    %v571 = vld [vmem:[#allocation2 + $0x458] sm:$0xf]
    %v572 = vld [vmem:[#allocation2 + $0x45c] sm:$0xf]
    %v573 = vld [vmem:[#allocation2 + $0x460] sm:$0xf]
    %v574 = vld [vmem:[#allocation2 + $0x464] sm:$0xf]
    %v575 = vld [vmem:[#allocation2 + $0x468] sm:$0xf]
    %v576 = vld [vmem:[#allocation2 + $0x46c] sm:$0xf]
    %v577 = vld [vmem:[#allocation2 + $0x470] sm:$0xf]
    %v578 = vld [vmem:[#allocation2 + $0x474] sm:$0xf]
    %v579 = vld [vmem:[#allocation2 + $0x478] sm:$0xf]
    %v580 = vld [vmem:[#allocation2 + $0x47c] sm:$0xf]
    %v581 = vld [vmem:[#allocation2 + $0x480] sm:$0xf]
    %v582 = vld [vmem:[#allocation2 + $0x484] sm:$0xf]
    %v583 = vld [vmem:[#allocation2 + $0x488] sm:$0xf]
    %v584 = vld [vmem:[#allocation2 + $0x48c] sm:$0xf]
    %v585 = vld [vmem:[#allocation2 + $0x490] sm:$0xf]
    %v586 = vld [vmem:[#allocation2 + $0x494] sm:$0xf]
    %v587 = vld [vmem:[%s2] sm:$0x1]
    %v589 = vlaneseq
    %v590 = vshrl.u32 %v589, 7
    %v591 = vsub.s32 0, %v590
    %v592 = vrot.slane %v587, %v591
    %v888 = vunpack.c.l.b16 %v293
    %v889 = vunpack.c.l.b16 %v294
    %v890 = vunpack.c.l.b16 %v295
    %v891 = vunpack.c.l.b16 %v296
    %v892 = vunpack.c.l.b16 %v297
    %v893 = vunpack.c.l.b16 %v298
    %v894 = vunpack.c.l.b16 %v299
    %v895 = vunpack.c.l.b16 %v300
    %v896 = vunpack.c.l.b16 %v301
    %v897 = vunpack.c.l.b16 %v302
    %v898 = vunpack.c.l.b16 %v303
    %v899 = vunpack.c.l.b16 %v304
    %v900 = vunpack.c.l.b16 %v305
    %v901 = vunpack.c.l.b16 %v306
    %v902 = vunpack.c.l.b16 %v307
    %v903 = vunpack.c.l.b16 %v308
    %v904 = vunpack.c.l.b16 %v309
    %v905 = vunpack.c.l.b16 %v310
    %v906 = vunpack.c.l.b16 %v311
    %v907 = vunpack.c.l.b16 %v312
    %v908 = vunpack.c.l.b16 %v313
    %v909 = vunpack.c.l.b16 %v314
    %v910 = vunpack.c.l.b16 %v315
    %v911 = vunpack.c.l.b16 %v316
    %v912 = vunpack.c.l.b16 %v317
    %v913 = vunpack.c.l.b16 %v318
    %v914 = vunpack.c.l.b16 %v319
    %v915 = vunpack.c.l.b16 %v320
    %v916 = vunpack.c.l.b16 %v321
    %v917 = vunpack.c.l.b16 %v322
    %v918 = vunpack.c.l.b16 %v323
    %v919 = vunpack.c.l.b16 %v324
    %v920 = vunpack.c.l.b16 %v325
    %v921 = vunpack.c.l.b16 %v326
    %v922 = vunpack.c.l.b16 %v327
    %v923 = vunpack.c.l.b16 %v328
    %v924 = vunpack.c.l.b16 %v329
    %v925 = vunpack.c.l.b16 %v330
    %v926 = vunpack.c.l.b16 %v331
    %v927 = vunpack.c.l.b16 %v332
    %v928 = vunpack.c.l.b16 %v333
    %v929 = vunpack.c.l.b16 %v334
    %v930 = vunpack.c.l.b16 %v335
    %v931 = vunpack.c.l.b16 %v336
    %v932 = vunpack.c.l.b16 %v337
    %v933 = vunpack.c.l.b16 %v338
    %v934 = vunpack.c.l.b16 %v339
    %v935 = vunpack.c.l.b16 %v340
    %v936 = vunpack.c.l.b16 %v341
    %v937 = vunpack.c.l.b16 %v342
    %v938 = vunpack.c.l.b16 %v343
    %v939 = vunpack.c.l.b16 %v344
    %v940 = vunpack.c.l.b16 %v345
    %v941 = vunpack.c.l.b16 %v346
    %v942 = vunpack.c.l.b16 %v347
    %v943 = vunpack.c.l.b16 %v348
    %v944 = vunpack.c.l.b16 %v349
    %v945 = vunpack.c.l.b16 %v350
    %v946 = vunpack.c.l.b16 %v351
    %v947 = vunpack.c.l.b16 %v352
    %v948 = vunpack.c.l.b16 %v353
    %v949 = vunpack.c.l.b16 %v354
    %v950 = vunpack.c.l.b16 %v355
    %v951 = vunpack.c.l.b16 %v356
    %v952 = vunpack.c.l.b16 %v357
    %v953 = vunpack.c.l.b16 %v358
    %v954 = vunpack.c.l.b16 %v359
    %v955 = vunpack.c.l.b16 %v360
    %v956 = vunpack.c.l.b16 %v361
    %v957 = vunpack.c.l.b16 %v362
    %v958 = vunpack.c.l.b16 %v363
    %v959 = vunpack.c.l.b16 %v364
    %v960 = vunpack.c.l.b16 %v365
    %v961 = vunpack.c.l.b16 %v366
    %v962 = vunpack.c.l.b16 %v367
    %v963 = vunpack.c.l.b16 %v368
    %v964 = vunpack.c.l.b16 %v369
    %v965 = vunpack.c.l.b16 %v370
    %v966 = vunpack.c.l.b16 %v371
    %v967 = vunpack.c.l.b16 %v372
    %v968 = vunpack.c.l.b16 %v373
    %v969 = vunpack.c.l.b16 %v374
    %v970 = vunpack.c.l.b16 %v375
    %v971 = vunpack.c.l.b16 %v376
    %v972 = vunpack.c.l.b16 %v377
    %v973 = vunpack.c.l.b16 %v378
    %v974 = vunpack.c.l.b16 %v379
    %v975 = vunpack.c.l.b16 %v380
    %v976 = vunpack.c.l.b16 %v381
    %v977 = vunpack.c.l.b16 %v382
    %v978 = vunpack.c.l.b16 %v383
    %v979 = vunpack.c.l.b16 %v384
    %v980 = vunpack.c.l.b16 %v385
    %v981 = vunpack.c.l.b16 %v386
    %v982 = vunpack.c.l.b16 %v387
    %v983 = vunpack.c.l.b16 %v388
    %v984 = vunpack.c.l.b16 %v389
    %v985 = vunpack.c.l.b16 %v390
    %v986 = vunpack.c.l.b16 %v391
    %v987 = vunpack.c.l.b16 %v392
    %v988 = vunpack.c.l.b16 %v393
    %v989 = vunpack.c.l.b16 %v394
    %v990 = vunpack.c.l.b16 %v395
    %v991 = vunpack.c.l.b16 %v396
    %v992 = vunpack.c.l.b16 %v397
    %v993 = vunpack.c.l.b16 %v398
    %v994 = vunpack.c.l.b16 %v399
    %v995 = vunpack.c.l.b16 %v400
    %v996 = vunpack.c.l.b16 %v401
    %v997 = vunpack.c.l.b16 %v402
    %v998 = vunpack.c.l.b16 %v403
    %v999 = vunpack.c.l.b16 %v404
    %v1000 = vunpack.c.l.b16 %v405
    %v1001 = vunpack.c.l.b16 %v406
    %v1002 = vunpack.c.l.b16 %v407
    %v1003 = vunpack.c.l.b16 %v408
    %v1004 = vunpack.c.l.b16 %v409
    %v1005 = vunpack.c.l.b16 %v410
    %v1006 = vunpack.c.l.b16 %v411
    %v1007 = vunpack.c.l.b16 %v412
    %v1008 = vunpack.c.l.b16 %v413
    %v1009 = vunpack.c.l.b16 %v414
    %v1010 = vunpack.c.l.b16 %v415
    %v1011 = vunpack.c.l.b16 %v416
    %v1012 = vunpack.c.l.b16 %v417
    %v1013 = vunpack.c.l.b16 %v418
    %v1014 = vunpack.c.l.b16 %v419
    %v1015 = vunpack.c.l.b16 %v420
    %v1016 = vunpack.c.l.b16 %v421
    %v1017 = vunpack.c.l.b16 %v422
    %v1018 = vunpack.c.l.b16 %v423
    %v1019 = vunpack.c.l.b16 %v424
    %v1020 = vunpack.c.l.b16 %v425
    %v1021 = vunpack.c.l.b16 %v426
    %v1022 = vunpack.c.l.b16 %v427
    %v1023 = vunpack.c.l.b16 %v428
    %v1024 = vunpack.c.l.b16 %v429
    %v1025 = vunpack.c.l.b16 %v430
    %v1026 = vunpack.c.l.b16 %v431
    %v1027 = vunpack.c.l.b16 %v432
    %v1028 = vunpack.c.l.b16 %v433
    %v1029 = vunpack.c.l.b16 %v434
    %v1030 = vunpack.c.l.b16 %v435
    %v1031 = vunpack.c.l.b16 %v436
    %v1032 = vunpack.c.l.b16 %v437
    %v1033 = vunpack.c.l.b16 %v438
    %v1034 = vunpack.c.l.b16 %v439
    %v1035 = vunpack.c.l.b16 %v440
    %v1036 = vunpack.c.l.b16 %v441
    %v1037 = vunpack.c.l.b16 %v442
    %v1038 = vunpack.c.l.b16 %v443
    %v1039 = vunpack.c.l.b16 %v444
    %v1040 = vunpack.c.l.b16 %v445
    %v1041 = vunpack.c.l.b16 %v446
    %v1042 = vunpack.c.l.b16 %v447
    %v1043 = vunpack.c.l.b16 %v448
    %v1044 = vunpack.c.l.b16 %v449
    %v1045 = vunpack.c.l.b16 %v450
    %v1046 = vunpack.c.l.b16 %v451
    %v1047 = vunpack.c.l.b16 %v452
    %v1048 = vunpack.c.l.b16 %v453
    %v1049 = vunpack.c.l.b16 %v454
    %v1050 = vunpack.c.l.b16 %v455
    %v1051 = vunpack.c.l.b16 %v456
    %v1052 = vunpack.c.l.b16 %v457
    %v1053 = vunpack.c.l.b16 %v458
    %v1054 = vunpack.c.l.b16 %v459
    %v1055 = vunpack.c.l.b16 %v460
    %v1056 = vunpack.c.l.b16 %v461
    %v1057 = vunpack.c.l.b16 %v462
    %v1058 = vunpack.c.l.b16 %v463
    %v1059 = vunpack.c.l.b16 %v464
    %v1060 = vunpack.c.l.b16 %v465
    %v1061 = vunpack.c.l.b16 %v466
    %v1062 = vunpack.c.l.b16 %v467
    %v1063 = vunpack.c.l.b16 %v468
    %v1064 = vunpack.c.l.b16 %v469
    %v1065 = vunpack.c.l.b16 %v470
    %v1066 = vunpack.c.l.b16 %v471
    %v1067 = vunpack.c.l.b16 %v472
    %v1068 = vunpack.c.l.b16 %v473
    %v1069 = vunpack.c.l.b16 %v474
    %v1070 = vunpack.c.l.b16 %v475
    %v1071 = vunpack.c.l.b16 %v476
    %v1072 = vunpack.c.l.b16 %v477
    %v1073 = vunpack.c.l.b16 %v478
    %v1074 = vunpack.c.l.b16 %v479
    %v1075 = vunpack.c.l.b16 %v480
    %v1076 = vunpack.c.l.b16 %v481
    %v1077 = vunpack.c.l.b16 %v482
    %v1078 = vunpack.c.l.b16 %v483
    %v1079 = vunpack.c.l.b16 %v484
    %v1080 = vunpack.c.l.b16 %v485
    %v1081 = vunpack.c.l.b16 %v486
    %v1082 = vunpack.c.l.b16 %v487
    %v1083 = vunpack.c.l.b16 %v488
    %v1084 = vunpack.c.l.b16 %v489
    %v1085 = vunpack.c.l.b16 %v490
    %v1086 = vunpack.c.l.b16 %v491
    %v1087 = vunpack.c.l.b16 %v492
    %v1088 = vunpack.c.l.b16 %v493
    %v1089 = vunpack.c.l.b16 %v494
    %v1090 = vunpack.c.l.b16 %v495
    %v1091 = vunpack.c.l.b16 %v496
    %v1092 = vunpack.c.l.b16 %v497
    %v1093 = vunpack.c.l.b16 %v498
    %v1094 = vunpack.c.l.b16 %v499
    %v1095 = vunpack.c.l.b16 %v500
    %v1096 = vunpack.c.l.b16 %v501
    %v1097 = vunpack.c.l.b16 %v502
    %v1098 = vunpack.c.l.b16 %v503
    %v1099 = vunpack.c.l.b16 %v504
    %v1100 = vunpack.c.l.b16 %v505
    %v1101 = vunpack.c.l.b16 %v506
    %v1102 = vunpack.c.l.b16 %v507
    %v1103 = vunpack.c.l.b16 %v508
    %v1104 = vunpack.c.l.b16 %v509
    %v1105 = vunpack.c.l.b16 %v510
    %v1106 = vunpack.c.l.b16 %v511
    %v1107 = vunpack.c.l.b16 %v512
    %v1108 = vunpack.c.l.b16 %v513
    %v1109 = vunpack.c.l.b16 %v514
    %v1110 = vunpack.c.l.b16 %v515
    %v1111 = vunpack.c.l.b16 %v516
    %v1112 = vunpack.c.l.b16 %v517
    %v1113 = vunpack.c.l.b16 %v518
    %v1114 = vunpack.c.l.b16 %v519
    %v1115 = vunpack.c.l.b16 %v520
    %v1116 = vunpack.c.l.b16 %v521
    %v1117 = vunpack.c.l.b16 %v522
    %v1118 = vunpack.c.l.b16 %v523
    %v1119 = vunpack.c.l.b16 %v524
    %v1120 = vunpack.c.l.b16 %v525
    %v1121 = vunpack.c.l.b16 %v526
    %v1122 = vunpack.c.l.b16 %v527
    %v1123 = vunpack.c.l.b16 %v528
    %v1124 = vunpack.c.l.b16 %v529
    %v1125 = vunpack.c.l.b16 %v530
    %v1126 = vunpack.c.l.b16 %v531
    %v1127 = vunpack.c.l.b16 %v532
    %v1128 = vunpack.c.l.b16 %v533
    %v1129 = vunpack.c.l.b16 %v534
    %v1130 = vunpack.c.l.b16 %v535
    %v1131 = vunpack.c.l.b16 %v536
    %v1132 = vunpack.c.l.b16 %v537
    %v1133 = vunpack.c.l.b16 %v538
    %v1134 = vunpack.c.l.b16 %v539
    %v1135 = vunpack.c.l.b16 %v540
    %v1136 = vunpack.c.l.b16 %v541
    %v1137 = vunpack.c.l.b16 %v542
    %v1138 = vunpack.c.l.b16 %v543
    %v1139 = vunpack.c.l.b16 %v544
    %v1140 = vunpack.c.l.b16 %v545
    %v1141 = vunpack.c.l.b16 %v546
    %v1142 = vunpack.c.l.b16 %v547
    %v1143 = vunpack.c.l.b16 %v548
    %v1144 = vunpack.c.l.b16 %v549
    %v1145 = vunpack.c.l.b16 %v550
    %v1146 = vunpack.c.l.b16 %v551
    %v1147 = vunpack.c.l.b16 %v552
    %v1148 = vunpack.c.l.b16 %v553
    %v1149 = vunpack.c.l.b16 %v554
    %v1150 = vunpack.c.l.b16 %v555
    %v1151 = vunpack.c.l.b16 %v556
    %v1152 = vunpack.c.l.b16 %v557
    %v1153 = vunpack.c.l.b16 %v558
    %v1154 = vunpack.c.l.b16 %v559
    %v1155 = vunpack.c.l.b16 %v560
    %v1156 = vunpack.c.l.b16 %v561
    %v1157 = vunpack.c.l.b16 %v562
    %v1158 = vunpack.c.l.b16 %v563
    %v1159 = vunpack.c.l.b16 %v564
    %v1160 = vunpack.c.l.b16 %v565
    %v1161 = vunpack.c.l.b16 %v566
    %v1162 = vunpack.c.l.b16 %v567
    %v1163 = vunpack.c.l.b16 %v568
    %v1164 = vunpack.c.l.b16 %v569
    %v1165 = vunpack.c.l.b16 %v570
    %v1166 = vunpack.c.l.b16 %v571
    %v1167 = vunpack.c.l.b16 %v572
    %v1168 = vunpack.c.l.b16 %v573
    %v1169 = vunpack.c.l.b16 %v574
    %v1170 = vunpack.c.l.b16 %v575
    %v1171 = vunpack.c.l.b16 %v576
    %v1172 = vunpack.c.l.b16 %v577
    %v1173 = vunpack.c.l.b16 %v578
    %v1174 = vunpack.c.l.b16 %v579
    %v1175 = vunpack.c.l.b16 %v580
    %v1176 = vunpack.c.l.b16 %v581
    %v1177 = vunpack.c.l.b16 %v582
    %v1178 = vunpack.c.l.b16 %v583
    %v1179 = vunpack.c.l.b16 %v584
    %v1180 = vunpack.c.l.b16 %v585
    %v1181 = vunpack.c.l.b16 %v586
    %v1182 = vpack.c.b16 %v889, %v888
    %v1183 = vpack.c.b16 %v891, %v890
    %v1184 = vpack.c.b16 %v893, %v892
    %v1185 = vpack.c.b16 %v895, %v894
    %v1186 = vpack.c.b16 %v897, %v896
    %v1187 = vpack.c.b16 %v899, %v898
    %v1188 = vpack.c.b16 %v901, %v900
    %v1189 = vpack.c.b16 %v903, %v902
    %v1190 = vpack.c.b16 %v905, %v904
    %v1191 = vpack.c.b16 %v907, %v906
    %v1192 = vpack.c.b16 %v909, %v908
    %v1193 = vpack.c.b16 %v911, %v910
    %v1194 = vpack.c.b16 %v913, %v912
    %v1195 = vpack.c.b16 %v915, %v914
    %v1196 = vpack.c.b16 %v917, %v916
    %v1197 = vpack.c.b16 %v919, %v918
    %v1198 = vpack.c.b16 %v921, %v920
    %v1199 = vpack.c.b16 %v923, %v922
    %v1200 = vpack.c.b16 %v925, %v924
    %v1201 = vpack.c.b16 %v927, %v926
    %v1202 = vpack.c.b16 %v929, %v928
    %v1203 = vpack.c.b16 %v931, %v930
    %v1204 = vpack.c.b16 %v933, %v932
    %v1205 = vpack.c.b16 %v935, %v934
    %v1206 = vpack.c.b16 %v937, %v936
    %v1207 = vpack.c.b16 %v939, %v938
    %v1208 = vpack.c.b16 %v941, %v940
    %v1209 = vpack.c.b16 %v943, %v942
    %v1210 = vpack.c.b16 %v945, %v944
    %v1211 = vpack.c.b16 %v947, %v946
    %v1212 = vpack.c.b16 %v949, %v948
    %v1213 = vpack.c.b16 %v951, %v950
    %v1214 = vpack.c.b16 %v953, %v952
    %v1215 = vpack.c.b16 %v955, %v954
    %v1216 = vpack.c.b16 %v957, %v956
    %v1217 = vpack.c.b16 %v959, %v958
    %v1218 = vpack.c.b16 %v961, %v960
    %v1219 = vpack.c.b16 %v963, %v962
    %v1220 = vpack.c.b16 %v965, %v964
    %v1221 = vpack.c.b16 %v967, %v966
    %v1222 = vpack.c.b16 %v969, %v968
    %v1223 = vpack.c.b16 %v971, %v970
    %v1224 = vpack.c.b16 %v973, %v972
    %v1225 = vpack.c.b16 %v975, %v974
    %v1226 = vpack.c.b16 %v977, %v976
    %v1227 = vpack.c.b16 %v979, %v978
    %v1228 = vpack.c.b16 %v981, %v980
    %v1229 = vpack.c.b16 %v983, %v982
    %v1230 = vpack.c.b16 %v985, %v984
    %v1231 = vpack.c.b16 %v987, %v986
    %v1232 = vpack.c.b16 %v989, %v988
    %v1233 = vpack.c.b16 %v991, %v990
    %v1234 = vpack.c.b16 %v993, %v992
    %v1235 = vpack.c.b16 %v995, %v994
    %v1236 = vpack.c.b16 %v997, %v996
    %v1237 = vpack.c.b16 %v999, %v998
    %v1238 = vpack.c.b16 %v1001, %v1000
    %v1239 = vpack.c.b16 %v1003, %v1002
    %v1240 = vpack.c.b16 %v1005, %v1004
    %v1241 = vpack.c.b16 %v1007, %v1006
    %v1242 = vpack.c.b16 %v1009, %v1008
    %v1243 = vpack.c.b16 %v1011, %v1010
    %v1244 = vpack.c.b16 %v1013, %v1012
    %v1245 = vpack.c.b16 %v1015, %v1014
    %v1246 = vpack.c.b16 %v1017, %v1016
    %v1247 = vpack.c.b16 %v1019, %v1018
    %v1248 = vpack.c.b16 %v1021, %v1020
    %v1249 = vpack.c.b16 %v1023, %v1022
    %v1250 = vpack.c.b16 %v1025, %v1024
    %v1251 = vpack.c.b16 %v1027, %v1026
    %v1252 = vpack.c.b16 %v1029, %v1028
    %v1253 = vpack.c.b16 %v1031, %v1030
    %v1254 = vpack.c.b16 %v1033, %v1032
    %v1255 = vpack.c.b16 %v1035, %v1034
    %v1256 = vpack.c.b16 %v1037, %v1036
    %v1257 = vpack.c.b16 %v1039, %v1038
    %v1258 = vpack.c.b16 %v1041, %v1040
    %v1259 = vpack.c.b16 %v1043, %v1042
    %v1260 = vpack.c.b16 %v1045, %v1044
    %v1261 = vpack.c.b16 %v1047, %v1046
    %v1262 = vpack.c.b16 %v1049, %v1048
    %v1263 = vpack.c.b16 %v1051, %v1050
    %v1264 = vpack.c.b16 %v1053, %v1052
    %v1265 = vpack.c.b16 %v1055, %v1054
    %v1266 = vpack.c.b16 %v1057, %v1056
    %v1267 = vpack.c.b16 %v1059, %v1058
    %v1268 = vpack.c.b16 %v1061, %v1060
    %v1269 = vpack.c.b16 %v1063, %v1062
    %v1270 = vpack.c.b16 %v1065, %v1064
    %v1271 = vpack.c.b16 %v1067, %v1066
    %v1272 = vpack.c.b16 %v1069, %v1068
    %v1273 = vpack.c.b16 %v1071, %v1070
    %v1274 = vpack.c.b16 %v1073, %v1072
    %v1275 = vpack.c.b16 %v1075, %v1074
    %v1276 = vpack.c.b16 %v1077, %v1076
    %v1277 = vpack.c.b16 %v1079, %v1078
    %v1278 = vpack.c.b16 %v1081, %v1080
    %v1279 = vpack.c.b16 %v1083, %v1082
    %v1280 = vpack.c.b16 %v1085, %v1084
    %v1281 = vpack.c.b16 %v1087, %v1086
    %v1282 = vpack.c.b16 %v1089, %v1088
    %v1283 = vpack.c.b16 %v1091, %v1090
    %v1284 = vpack.c.b16 %v1093, %v1092
    %v1285 = vpack.c.b16 %v1095, %v1094
    %v1286 = vpack.c.b16 %v1097, %v1096
    %v1287 = vpack.c.b16 %v1099, %v1098
    %v1288 = vpack.c.b16 %v1101, %v1100
    %v1289 = vpack.c.b16 %v1103, %v1102
    %v1290 = vpack.c.b16 %v1105, %v1104
    %v1291 = vpack.c.b16 %v1107, %v1106
    %v1292 = vpack.c.b16 %v1109, %v1108
    %v1293 = vpack.c.b16 %v1111, %v1110
    %v1294 = vpack.c.b16 %v1113, %v1112
    %v1295 = vpack.c.b16 %v1115, %v1114
    %v1296 = vpack.c.b16 %v1117, %v1116
    %v1297 = vpack.c.b16 %v1119, %v1118
    %v1298 = vpack.c.b16 %v1121, %v1120
    %v1299 = vpack.c.b16 %v1123, %v1122
    %v1300 = vpack.c.b16 %v1125, %v1124
    %v1301 = vpack.c.b16 %v1127, %v1126
    %v1302 = vpack.c.b16 %v1129, %v1128
    %v1303 = vpack.c.b16 %v1131, %v1130
    %v1304 = vpack.c.b16 %v1133, %v1132
    %v1305 = vpack.c.b16 %v1135, %v1134
    %v1306 = vpack.c.b16 %v1137, %v1136
    %v1307 = vpack.c.b16 %v1139, %v1138
    %v1308 = vpack.c.b16 %v1141, %v1140
    %v1309 = vpack.c.b16 %v1143, %v1142
    %v1310 = vpack.c.b16 %v1145, %v1144
    %v1311 = vpack.c.b16 %v1147, %v1146
    %v1312 = vpack.c.b16 %v1149, %v1148
    %v1313 = vpack.c.b16 %v1151, %v1150
    %v1314 = vpack.c.b16 %v1153, %v1152
    %v1315 = vpack.c.b16 %v1155, %v1154
    %v1316 = vpack.c.b16 %v1157, %v1156
    %v1317 = vpack.c.b16 %v1159, %v1158
    %v1318 = vpack.c.b16 %v1161, %v1160
    %v1319 = vpack.c.b16 %v1163, %v1162
    %v1320 = vpack.c.b16 %v1165, %v1164
    %v1321 = vpack.c.b16 %v1167, %v1166
    %v1322 = vpack.c.b16 %v1169, %v1168
    %v1323 = vpack.c.b16 %v1171, %v1170
    %v1324 = vpack.c.b16 %v1173, %v1172
    %v1325 = vpack.c.b16 %v1175, %v1174
    %v1326 = vpack.c.b16 %v1177, %v1176
    %v1327 = vpack.c.b16 %v1179, %v1178
    %v1328 = vpack.c.b16 %v1181, %v1180
    %vm1476 = vcmask 392192
    %v1478 = vsel %vm1476, %v292, 0
    %1480 = vmatprep.subr.bf16.mxu0 0
    %1481 = vmatpush1.bf16.msra.mxu0 %v1182
    %1482 = vmatprep.subr.bf16.mxu0 0
    %1483 = vmatpush1.bf16.msra.mxu0 %v1183
    %1484 = vmatprep.subr.bf16.mxu0 0
    %1485 = vmatpush1.bf16.msra.mxu0 %v1184
    %1486 = vmatprep.subr.bf16.mxu0 0
    %1487 = vmatpush1.bf16.msra.mxu0 %v1185
    %1488 = vmatprep.subr.bf16.mxu0 0
    %1489 = vmatpush1.bf16.msra.mxu0 %v1186
    %1490 = vmatprep.subr.bf16.mxu0 0
    %1491 = vmatpush1.bf16.msra.mxu0 %v1187
    %1492 = vmatprep.subr.bf16.mxu0 0
    %1493 = vmatpush1.bf16.msra.mxu0 %v1188
    %1494 = vmatprep.subr.bf16.mxu0 0
    %1495 = vmatpush1.bf16.msra.mxu0 %v1189
    %1496 = vmatprep.subr.bf16.mxu0 0
    %1497 = vmatpush1.bf16.msra.mxu0 %v1190
    %1498 = vmatprep.subr.bf16.mxu0 0
    %1499 = vmatpush1.bf16.msra.mxu0 %v1191
    %1500 = vmatprep.subr.bf16.mxu0 0
    %1501 = vmatpush1.bf16.msra.mxu0 %v1192
    %1502 = vmatprep.subr.bf16.mxu0 0
    %1503 = vmatpush1.bf16.msra.mxu0 %v1193
    %1504 = vmatprep.subr.bf16.mxu0 0
    %1505 = vmatpush1.bf16.msra.mxu0 %v1194
    %1506 = vmatprep.subr.bf16.mxu0 0
    %1507 = vmatpush1.bf16.msra.mxu0 %v1195
    %1508 = vmatprep.subr.bf16.mxu0 0
    %1509 = vmatpush1.bf16.msra.mxu0 %v1196
    %1510 = vmatprep.subr.bf16.mxu0 0
    %1511 = vmatpush1.bf16.msra.mxu0 %v1197
    %1512 = vmatprep.mubr.bf16.mxu0 %v275
    %1513 = vmatmul.mubr.bf16.gmra.mrb[0].mxu0 %v274
    %v1514 = vpop.f32.mrb[0].mxu0
    %v1515 = vadd.f32 %v592, %v1514
    %v1516 = vpop.f32.mrb[0].mxu0
    %v1517 = vpop.f32.mrb[0].mxu0
    %v1518 = vpop.f32.mrb[0].mxu0
    %1519 = vdwg.mxu0
    %1520 = vmatprep.subr.bf16.mxu0 0
    %1521 = vmatpush1.bf16.msra.mxu0 %v1198
    %1522 = vmatprep.subr.bf16.mxu0 0
    %1523 = vmatpush1.bf16.msra.mxu0 %v1199
    %1524 = vmatprep.subr.bf16.mxu0 0
    %1525 = vmatpush1.bf16.msra.mxu0 %v1200
    %1526 = vmatprep.subr.bf16.mxu0 0
    %1527 = vmatpush1.bf16.msra.mxu0 %v1201
    %1528 = vmatprep.subr.bf16.mxu0 0
    %1529 = vmatpush1.bf16.msra.mxu0 %v1202
    %1530 = vmatprep.subr.bf16.mxu0 0
    %1531 = vmatpush1.bf16.msra.mxu0 %v1203
    %1532 = vmatprep.subr.bf16.mxu0 0
    %1533 = vmatpush1.bf16.msra.mxu0 %v1204
    %1534 = vmatprep.subr.bf16.mxu0 0
    %1535 = vmatpush1.bf16.msra.mxu0 %v1205
    %1536 = vmatprep.subr.bf16.mxu0 0
    %1537 = vmatpush1.bf16.msra.mxu0 %v1206
    %1538 = vmatprep.subr.bf16.mxu0 0
    %1539 = vmatpush1.bf16.msra.mxu0 %v1207
    %1540 = vmatprep.subr.bf16.mxu0 0
    %1541 = vmatpush1.bf16.msra.mxu0 %v1208
    %1542 = vmatprep.subr.bf16.mxu0 0
    %1543 = vmatpush1.bf16.msra.mxu0 %v1209
    %1544 = vmatprep.subr.bf16.mxu0 0
    %1545 = vmatpush1.bf16.msra.mxu0 %v1210
    %1546 = vmatprep.subr.bf16.mxu0 0
    %1547 = vmatpush1.bf16.msra.mxu0 %v1211
    %1548 = vmatprep.subr.bf16.mxu0 0
    %1549 = vmatpush1.bf16.msra.mxu0 %v1212
    %1550 = vmatprep.subr.bf16.mxu0 0
    %1551 = vmatpush1.bf16.msra.mxu0 %v1213
    %1552 = vmatprep.mubr.bf16.mxu0 %v277
    %1553 = vmatmul.mubr.bf16.gmra.mrb[0].mxu0 %v276
    %v1554 = vpop.f32.mrb[0].mxu0
    %v1555 = vadd.f32 %v1515, %v1554
    %v1556 = vpop.f32.mrb[0].mxu0
    %v1557 = vpop.f32.mrb[0].mxu0
    %v1558 = vpop.f32.mrb[0].mxu0
    %1559 = vdwg.mxu0
    %1560 = vmatprep.subr.bf16.mxu0 0
    %1561 = vmatpush1.bf16.msra.mxu0 %v1214
    %1562 = vmatprep.subr.bf16.mxu0 0
    %1563 = vmatpush1.bf16.msra.mxu0 %v1215
    %1564 = vmatprep.subr.bf16.mxu0 0
    %1565 = vmatpush1.bf16.msra.mxu0 %v1216
    %1566 = vmatprep.subr.bf16.mxu0 0
    %1567 = vmatpush1.bf16.msra.mxu0 %v1217
    %1568 = vmatprep.subr.bf16.mxu0 0
    %1569 = vmatpush1.bf16.msra.mxu0 %v1218
    %1570 = vmatprep.subr.bf16.mxu0 0
    %1571 = vmatpush1.bf16.msra.mxu0 %v1219
    %1572 = vmatprep.subr.bf16.mxu0 0
    %1573 = vmatpush1.bf16.msra.mxu0 %v1220
    %1574 = vmatprep.subr.bf16.mxu0 0
    %1575 = vmatpush1.bf16.msra.mxu0 %v1221
    %1576 = vmatprep.subr.bf16.mxu0 0
    %1577 = vmatpush1.bf16.msra.mxu0 %v1222
    %1578 = vmatprep.subr.bf16.mxu0 0
    %1579 = vmatpush1.bf16.msra.mxu0 %v1223
    %1580 = vmatprep.subr.bf16.mxu0 0
    %1581 = vmatpush1.bf16.msra.mxu0 %v1224
    %1582 = vmatprep.subr.bf16.mxu0 0
    %1583 = vmatpush1.bf16.msra.mxu0 %v1225
    %1584 = vmatprep.subr.bf16.mxu0 0
    %1585 = vmatpush1.bf16.msra.mxu0 %v1226
    %1586 = vmatprep.subr.bf16.mxu0 0
    %1587 = vmatpush1.bf16.msra.mxu0 %v1227
    %1588 = vmatprep.subr.bf16.mxu0 0
    %1589 = vmatpush1.bf16.msra.mxu0 %v1228
    %1590 = vmatprep.subr.bf16.mxu0 0
    %1591 = vmatpush1.bf16.msra.mxu0 %v1229
    %1592 = vmatprep.mubr.bf16.mxu0 %v279
    %1593 = vmatmul.mubr.bf16.gmra.mrb[0].mxu0 %v278
    %v1594 = vpop.f32.mrb[0].mxu0
    %v1595 = vadd.f32 %v1555, %v1594
    %v1596 = vpop.f32.mrb[0].mxu0
    %v1597 = vpop.f32.mrb[0].mxu0
    %v1598 = vpop.f32.mrb[0].mxu0
    %1599 = vdwg.mxu0
    %1600 = vmatprep.subr.bf16.mxu0 0
    %1601 = vmatpush1.bf16.msra.mxu0 %v1230
    %1602 = vmatprep.subr.bf16.mxu0 0
    %1603 = vmatpush1.bf16.msra.mxu0 %v1231
    %1604 = vmatprep.subr.bf16.mxu0 0
    %1605 = vmatpush1.bf16.msra.mxu0 %v1232
    %1606 = vmatprep.subr.bf16.mxu0 0
    %1607 = vmatpush1.bf16.msra.mxu0 %v1233
    %1608 = vmatprep.subr.bf16.mxu0 0
    %1609 = vmatpush1.bf16.msra.mxu0 %v1234
    %1610 = vmatprep.subr.bf16.mxu0 0
    %1611 = vmatpush1.bf16.msra.mxu0 %v1235
    %1612 = vmatprep.subr.bf16.mxu0 0
    %1613 = vmatpush1.bf16.msra.mxu0 %v1236
    %1614 = vmatprep.subr.bf16.mxu0 0
    %1615 = vmatpush1.bf16.msra.mxu0 %v1237
    %1616 = vmatprep.subr.bf16.mxu0 0
    %1617 = vmatpush1.bf16.msra.mxu0 %v1238
    %1618 = vmatprep.subr.bf16.mxu0 0
    %1619 = vmatpush1.bf16.msra.mxu0 %v1239
    %1620 = vmatprep.subr.bf16.mxu0 0
    %1621 = vmatpush1.bf16.msra.mxu0 %v1240
    %1622 = vmatprep.subr.bf16.mxu0 0
    %1623 = vmatpush1.bf16.msra.mxu0 %v1241
    %1624 = vmatprep.subr.bf16.mxu0 0
    %1625 = vmatpush1.bf16.msra.mxu0 %v1242
    %1626 = vmatprep.subr.bf16.mxu0 0
    %1627 = vmatpush1.bf16.msra.mxu0 %v1243
    %1628 = vmatprep.subr.bf16.mxu0 0
    %1629 = vmatpush1.bf16.msra.mxu0 %v1244
    %1630 = vmatprep.subr.bf16.mxu0 0
    %1631 = vmatpush1.bf16.msra.mxu0 %v1245
    %1632 = vmatprep.mubr.bf16.mxu0 %v281
    %1633 = vmatmul.mubr.bf16.gmra.mrb[0].mxu0 %v280
    %v1634 = vpop.f32.mrb[0].mxu0
    %v1635 = vadd.f32 %v1595, %v1634
    %v1636 = vpop.f32.mrb[0].mxu0
    %v1637 = vpop.f32.mrb[0].mxu0
    %v1638 = vpop.f32.mrb[0].mxu0
    %1639 = vdwg.mxu0
    %1640 = vmatprep.subr.bf16.mxu0 0
    %1641 = vmatpush1.bf16.msra.mxu0 %v1246
    %1642 = vmatprep.subr.bf16.mxu0 0
    %1643 = vmatpush1.bf16.msra.mxu0 %v1247
    %1644 = vmatprep.subr.bf16.mxu0 0
    %1645 = vmatpush1.bf16.msra.mxu0 %v1248
    %1646 = vmatprep.subr.bf16.mxu0 0
    %1647 = vmatpush1.bf16.msra.mxu0 %v1249
    %1648 = vmatprep.subr.bf16.mxu0 0
    %1649 = vmatpush1.bf16.msra.mxu0 %v1250
    %1650 = vmatprep.subr.bf16.mxu0 0
    %1651 = vmatpush1.bf16.msra.mxu0 %v1251
    %1652 = vmatprep.subr.bf16.mxu0 0
    %1653 = vmatpush1.bf16.msra.mxu0 %v1252
    %1654 = vmatprep.subr.bf16.mxu0 0
    %1655 = vmatpush1.bf16.msra.mxu0 %v1253
    %1656 = vmatprep.subr.bf16.mxu0 0
    %1657 = vmatpush1.bf16.msra.mxu0 %v1254
    %1658 = vmatprep.subr.bf16.mxu0 0
    %1659 = vmatpush1.bf16.msra.mxu0 %v1255
    %1660 = vmatprep.subr.bf16.mxu0 0
    %1661 = vmatpush1.bf16.msra.mxu0 %v1256
    %1662 = vmatprep.subr.bf16.mxu0 0
    %1663 = vmatpush1.bf16.msra.mxu0 %v1257
    %1664 = vmatprep.subr.bf16.mxu0 0
    %1665 = vmatpush1.bf16.msra.mxu0 %v1258
    %1666 = vmatprep.subr.bf16.mxu0 0
    %1667 = vmatpush1.bf16.msra.mxu0 %v1259
    %1668 = vmatprep.subr.bf16.mxu0 0
    %1669 = vmatpush1.bf16.msra.mxu0 %v1260
    %1670 = vmatprep.subr.bf16.mxu0 0
    %1671 = vmatpush1.bf16.msra.mxu0 %v1261
    %1672 = vmatprep.mubr.bf16.mxu0 %v283
    %1673 = vmatmul.mubr.bf16.gmra.mrb[0].mxu0 %v282
    %v1674 = vpop.f32.mrb[0].mxu0
    %v1675 = vadd.f32 %v1635, %v1674
    %v1676 = vpop.f32.mrb[0].mxu0
    %v1677 = vpop.f32.mrb[0].mxu0
    %v1678 = vpop.f32.mrb[0].mxu0
    %1679 = vdwg.mxu0
    %1680 = vmatprep.subr.bf16.mxu0 0
    %1681 = vmatpush1.bf16.msra.mxu0 %v1262
    %1682 = vmatprep.subr.bf16.mxu0 0
    %1683 = vmatpush1.bf16.msra.mxu0 %v1263
    %1684 = vmatprep.subr.bf16.mxu0 0
    %1685 = vmatpush1.bf16.msra.mxu0 %v1264
    %1686 = vmatprep.subr.bf16.mxu0 0
    %1687 = vmatpush1.bf16.msra.mxu0 %v1265
    %1688 = vmatprep.subr.bf16.mxu0 0
    %1689 = vmatpush1.bf16.msra.mxu0 %v1266
    %1690 = vmatprep.subr.bf16.mxu0 0
    %1691 = vmatpush1.bf16.msra.mxu0 %v1267
    %1692 = vmatprep.subr.bf16.mxu0 0
    %1693 = vmatpush1.bf16.msra.mxu0 %v1268
    %1694 = vmatprep.subr.bf16.mxu0 0
    %1695 = vmatpush1.bf16.msra.mxu0 %v1269
    %1696 = vmatprep.subr.bf16.mxu0 0
    %1697 = vmatpush1.bf16.msra.mxu0 %v1270
    %1698 = vmatprep.subr.bf16.mxu0 0
    %1699 = vmatpush1.bf16.msra.mxu0 %v1271
    %1700 = vmatprep.subr.bf16.mxu0 0
    %1701 = vmatpush1.bf16.msra.mxu0 %v1272
    %1702 = vmatprep.subr.bf16.mxu0 0
    %1703 = vmatpush1.bf16.msra.mxu0 %v1273
    %1704 = vmatprep.subr.bf16.mxu0 0
    %1705 = vmatpush1.bf16.msra.mxu0 %v1274
    %1706 = vmatprep.subr.bf16.mxu0 0
    %1707 = vmatpush1.bf16.msra.mxu0 %v1275
    %1708 = vmatprep.subr.bf16.mxu0 0
    %1709 = vmatpush1.bf16.msra.mxu0 %v1276
    %1710 = vmatprep.subr.bf16.mxu0 0
    %1711 = vmatpush1.bf16.msra.mxu0 %v1277
    %1712 = vmatprep.mubr.bf16.mxu0 %v285
    %1713 = vmatmul.mubr.bf16.gmra.mrb[0].mxu0 %v284
    %v1714 = vpop.f32.mrb[0].mxu0
    %v1715 = vadd.f32 %v1675, %v1714
    %v1716 = vpop.f32.mrb[0].mxu0
    %v1717 = vpop.f32.mrb[0].mxu0
    %v1718 = vpop.f32.mrb[0].mxu0
    %1719 = vdwg.mxu0
    %1720 = vmatprep.subr.bf16.mxu0 0
    %1721 = vmatpush1.bf16.msra.mxu0 %v1278
    %1722 = vmatprep.subr.bf16.mxu0 0
    %1723 = vmatpush1.bf16.msra.mxu0 %v1279
    %1724 = vmatprep.subr.bf16.mxu0 0
    %1725 = vmatpush1.bf16.msra.mxu0 %v1280
    %1726 = vmatprep.subr.bf16.mxu0 0
    %1727 = vmatpush1.bf16.msra.mxu0 %v1281
    %1728 = vmatprep.subr.bf16.mxu0 0
    %1729 = vmatpush1.bf16.msra.mxu0 %v1282
    %1730 = vmatprep.subr.bf16.mxu0 0
    %1731 = vmatpush1.bf16.msra.mxu0 %v1283
    %1732 = vmatprep.subr.bf16.mxu0 0
    %1733 = vmatpush1.bf16.msra.mxu0 %v1284
    %1734 = vmatprep.subr.bf16.mxu0 0
    %1735 = vmatpush1.bf16.msra.mxu0 %v1285
    %1736 = vmatprep.subr.bf16.mxu0 0
    %1737 = vmatpush1.bf16.msra.mxu0 %v1286
    %1738 = vmatprep.subr.bf16.mxu0 0
    %1739 = vmatpush1.bf16.msra.mxu0 %v1287
    %1740 = vmatprep.subr.bf16.mxu0 0
    %1741 = vmatpush1.bf16.msra.mxu0 %v1288
    %1742 = vmatprep.subr.bf16.mxu0 0
    %1743 = vmatpush1.bf16.msra.mxu0 %v1289
    %1744 = vmatprep.subr.bf16.mxu0 0
    %1745 = vmatpush1.bf16.msra.mxu0 %v1290
    %1746 = vmatprep.subr.bf16.mxu0 0
    %1747 = vmatpush1.bf16.msra.mxu0 %v1291
    %1748 = vmatprep.subr.bf16.mxu0 0
    %1749 = vmatpush1.bf16.msra.mxu0 %v1292
    %1750 = vmatprep.subr.bf16.mxu0 0
    %1751 = vmatpush1.bf16.msra.mxu0 %v1293
    %1752 = vmatprep.mubr.bf16.mxu0 %v287
    %1753 = vmatmul.mubr.bf16.gmra.mrb[0].mxu0 %v286
    %v1754 = vpop.f32.mrb[0].mxu0
    %v1755 = vadd.f32 %v1715, %v1754
    %v1756 = vpop.f32.mrb[0].mxu0
    %v1757 = vpop.f32.mrb[0].mxu0
    %v1758 = vpop.f32.mrb[0].mxu0
    %1759 = vdwg.mxu0
    %1760 = vmatprep.subr.bf16.mxu0 0
    %1761 = vmatpush1.bf16.msra.mxu0 %v1294
    %1762 = vmatprep.subr.bf16.mxu0 0
    %1763 = vmatpush1.bf16.msra.mxu0 %v1295
    %1764 = vmatprep.subr.bf16.mxu0 0
    %1765 = vmatpush1.bf16.msra.mxu0 %v1296
    %1766 = vmatprep.subr.bf16.mxu0 0
    %1767 = vmatpush1.bf16.msra.mxu0 %v1297
    %1768 = vmatprep.subr.bf16.mxu0 0
    %1769 = vmatpush1.bf16.msra.mxu0 %v1298
    %1770 = vmatprep.subr.bf16.mxu0 0
    %1771 = vmatpush1.bf16.msra.mxu0 %v1299
    %1772 = vmatprep.subr.bf16.mxu0 0
    %1773 = vmatpush1.bf16.msra.mxu0 %v1300
    %1774 = vmatprep.subr.bf16.mxu0 0
    %1775 = vmatpush1.bf16.msra.mxu0 %v1301
    %1776 = vmatprep.subr.bf16.mxu0 0
    %1777 = vmatpush1.bf16.msra.mxu0 %v1302
    %1778 = vmatprep.subr.bf16.mxu0 0
    %1779 = vmatpush1.bf16.msra.mxu0 %v1303
    %1780 = vmatprep.subr.bf16.mxu0 0
    %1781 = vmatpush1.bf16.msra.mxu0 %v1304
    %1782 = vmatprep.subr.bf16.mxu0 0
    %1783 = vmatpush1.bf16.msra.mxu0 %v1305
    %1784 = vmatprep.subr.bf16.mxu0 0
    %1785 = vmatpush1.bf16.msra.mxu0 %v1306
    %1786 = vmatprep.subr.bf16.mxu0 0
    %1787 = vmatpush1.bf16.msra.mxu0 %v1307
    %1788 = vmatprep.subr.bf16.mxu0 0
    %1789 = vmatpush1.bf16.msra.mxu0 %v1308
    %1790 = vmatprep.subr.bf16.mxu0 0
    %1791 = vmatpush1.bf16.msra.mxu0 %v1309
    %1792 = vmatprep.mubr.bf16.mxu0 %v289
    %1793 = vmatmul.mubr.bf16.gmra.mrb[0].mxu0 %v288
    %v1794 = vpop.f32.mrb[0].mxu0
    %v1795 = vadd.f32 %v1755, %v1794
    %v1796 = vpop.f32.mrb[0].mxu0
    %v1797 = vpop.f32.mrb[0].mxu0
    %v1798 = vpop.f32.mrb[0].mxu0
    %1799 = vdwg.mxu0
    %1800 = vmatprep.subr.bf16.mxu0 0
    %1801 = vmatpush1.bf16.msra.mxu0 %v1310
    %1802 = vmatprep.subr.bf16.mxu0 0
    %1803 = vmatpush1.bf16.msra.mxu0 %v1311
    %1804 = vmatprep.subr.bf16.mxu0 0
    %1805 = vmatpush1.bf16.msra.mxu0 %v1312
    %1806 = vmatprep.subr.bf16.mxu0 0
    %1807 = vmatpush1.bf16.msra.mxu0 %v1313
    %1808 = vmatprep.subr.bf16.mxu0 0
    %1809 = vmatpush1.bf16.msra.mxu0 %v1314
    %1810 = vmatprep.subr.bf16.mxu0 0
    %1811 = vmatpush1.bf16.msra.mxu0 %v1315
    %1812 = vmatprep.subr.bf16.mxu0 0
    %1813 = vmatpush1.bf16.msra.mxu0 %v1316
    %1814 = vmatprep.subr.bf16.mxu0 0
    %1815 = vmatpush1.bf16.msra.mxu0 %v1317
    %1816 = vmatprep.subr.bf16.mxu0 0
    %1817 = vmatpush1.bf16.msra.mxu0 %v1318
    %1818 = vmatprep.subr.bf16.mxu0 0
    %1819 = vmatpush1.bf16.msra.mxu0 %v1319
    %1820 = vmatprep.subr.bf16.mxu0 0
    %1821 = vmatpush1.bf16.msra.mxu0 %v1320
    %1822 = vmatprep.subr.bf16.mxu0 0
    %1823 = vmatpush1.bf16.msra.mxu0 %v1321
    %1824 = vmatprep.subr.bf16.mxu0 0
    %1825 = vmatpush1.bf16.msra.mxu0 %v1322
    %1826 = vmatprep.subr.bf16.mxu0 0
    %1827 = vmatpush1.bf16.msra.mxu0 %v1323
    %1828 = vmatprep.subr.bf16.mxu0 0
    %1829 = vmatpush1.bf16.msra.mxu0 %v1324
    %1830 = vmatprep.subr.bf16.mxu0 0
    %1831 = vmatpush1.bf16.msra.mxu0 %v1325
    %1832 = vmatprep.mubr.bf16.mxu0 %v291
    %1833 = vmatmul.mubr.bf16.gmra.mrb[0].mxu0 %v290
    %v1834 = vpop.f32.mrb[0].mxu0
    %v1835 = vadd.f32 %v1795, %v1834
    %v1836 = vpop.f32.mrb[0].mxu0
    %v1837 = vpop.f32.mrb[0].mxu0
    %v1838 = vpop.f32.mrb[0].mxu0
    %1839 = vdwg.mxu0
    %1840 = vmatprep.subr.bf16.mxu0 0
    %1841 = vmatpush1.bf16.msra.mxu0 %v1326
    %1842 = vmatprep.subr.bf16.mxu0 0
    %1843 = vmatpush1.bf16.msra.mxu0 %v1327
    %1844 = vmatprep.subr.bf16.mxu0 0
    %1845 = vmatpush1.bf16.msra.mxu0 %v1328
    %1846 = vmatprep.subr.bf16.mxu0 0
    %1847 = vmatpush1.bf16.msra.mxu0 0
    %1848 = vmatprep.subr.bf16.mxu0 0
    %1849 = vmatpush1.bf16.msra.mxu0 0
    %1850 = vmatprep.subr.bf16.mxu0 0
    %1851 = vmatpush1.bf16.msra.mxu0 0
    %1852 = vmatprep.subr.bf16.mxu0 0
    %1853 = vmatpush1.bf16.msra.mxu0 0
    %1854 = vmatprep.subr.bf16.mxu0 0
    %1855 = vmatpush1.bf16.msra.mxu0 0
    %1856 = vmatprep.subr.bf16.mxu0 0
    %1857 = vmatpush1.bf16.msra.mxu0 0
    %1858 = vmatprep.subr.bf16.mxu0 0
    %1859 = vmatpush1.bf16.msra.mxu0 0
    %1860 = vmatprep.subr.bf16.mxu0 0
    %1861 = vmatpush1.bf16.msra.mxu0 0
    %1862 = vmatprep.subr.bf16.mxu0 0
    %1863 = vmatpush1.bf16.msra.mxu0 0
    %1864 = vmatprep.subr.bf16.mxu0 0
    %1865 = vmatpush1.bf16.msra.mxu0 0
    %1866 = vmatprep.subr.bf16.mxu0 0
    %1867 = vmatpush1.bf16.msra.mxu0 0
    %1868 = vmatprep.subr.bf16.mxu0 0
    %1869 = vmatpush1.bf16.msra.mxu0 0
    %1870 = vmatprep.subr.bf16.mxu0 0
    %1871 = vmatpush1.bf16.msra.mxu0 0
    %1872 = vmatprep.mubr.bf16.mxu0 0
    %1873 = vmatmul.mubr.bf16.gmra.mrb[0].mxu0 %v1478
    %v1874 = vpop.f32.mrb[0].mxu0
    %v1875 = vadd.f32 %v1835, %v1874
    %v1876 = vpop.f32.mrb[0].mxu0
    %v1877 = vpop.f32.mrb[0].mxu0
    %v1878 = vpop.f32.mrb[0].mxu0
    %1879 = vdwg.mxu0
    %v1880 = vmax.f32 %v1875, 0.0
    %v1881 = vld [vmem:[%s3] sm:$0xff]
    %v1882 = vld [vmem:[%s3 + $0x8] sm:$0xff]
    %v1883 = vld [vmem:[%s3 + $0x10] sm:$0xff]
    %v1884 = vld [vmem:[%s3 + $0x18] sm:$0xff]
    %v1885 = vld [vmem:[%s3 + $0x20] sm:$0xff]
    %v1886 = vld [vmem:[%s3 + $0x28] sm:$0xff]
    %v1887 = vld [vmem:[%s3 + $0x30] sm:$0xff]
    %v1888 = vld [vmem:[%s3 + $0x38] sm:$0xff]
    %v1889 = vld [vmem:[%s3 + $0x40] sm:$0xff]
    %v1890 = vld [vmem:[%s3 + $0x48] sm:$0xff]
    %v1891 = vld [vmem:[%s3 + $0x50] sm:$0xff]
    %v1892 = vld [vmem:[%s3 + $0x58] sm:$0xff]
    %v1893 = vld [vmem:[%s3 + $0x60] sm:$0xff]
    %v1894 = vld [vmem:[%s3 + $0x68] sm:$0xff]
    %v1895 = vld [vmem:[%s3 + $0x70] sm:$0xff]
    %v1896 = vld [vmem:[%s3 + $0x78] sm:$0xff]
    %v1897 = vld [vmem:[%s4] sm:$0x1]
    %v1899 = vlaneseq
    %v1900 = vshrl.u32 %v1899, 7
    %v1901 = vsub.s32 0, %v1900
    %v1902 = vrot.slane %v1897, %v1901
    %1904 = vmatprep.subr.mxu0 0.0
    %1905 = vmatpush1.msra.mxu0 %v1881
    %1906 = vmatprep.subr.mxu0 0.0
    %1907 = vmatpush1.msra.mxu0 %v1882
    %1908 = vmatprep.subr.mxu0 0.0
    %1909 = vmatpush1.msra.mxu0 %v1883
    %1910 = vmatprep.subr.mxu0 0.0
    %1911 = vmatpush1.msra.mxu0 %v1884
    %1912 = vmatprep.subr.mxu0 0.0
    %1913 = vmatpush1.msra.mxu0 %v1885
    %1914 = vmatprep.subr.mxu0 0.0
    %1915 = vmatpush1.msra.mxu0 %v1886
    %1916 = vmatprep.subr.mxu0 0.0
    %1917 = vmatpush1.msra.mxu0 %v1887
    %1918 = vmatprep.subr.mxu0 0.0
    %1919 = vmatpush1.msra.mxu0 %v1888
    %1920 = vmatprep.subr.mxu0 0.0
    %1921 = vmatpush1.msra.mxu0 %v1889
    %1922 = vmatprep.subr.mxu0 0.0
    %1923 = vmatpush1.msra.mxu0 %v1890
    %1924 = vmatprep.subr.mxu0 0.0
    %1925 = vmatpush1.msra.mxu0 %v1891
    %1926 = vmatprep.subr.mxu0 0.0
    %1927 = vmatpush1.msra.mxu0 %v1892
    %1928 = vmatprep.subr.mxu0 0.0
    %1929 = vmatpush1.msra.mxu0 %v1893
    %1930 = vmatprep.subr.mxu0 0.0
    %1931 = vmatpush1.msra.mxu0 %v1894
    %1932 = vmatprep.subr.mxu0 0.0
    %1933 = vmatpush1.msra.mxu0 %v1895
    %1934 = vmatprep.subr.mxu0 0.0
    %1935 = vmatpush1.msra.mxu0 %v1896
    %1936 = vmatprep.subr.mxu0 0.0
    %1937 = vmatpush1.msra.mxu0 0.0
    %1938 = vmatprep.subr.mxu0 0.0
    %1939 = vmatpush1.msra.mxu0 0.0
    %1940 = vmatprep.subr.mxu0 0.0
    %1941 = vmatpush1.msra.mxu0 0.0
    %1942 = vmatprep.subr.mxu0 0.0
    %1943 = vmatpush1.msra.mxu0 0.0
    %1944 = vmatprep.subr.mxu0 0.0
    %1945 = vmatpush1.msra.mxu0 0.0
    %1946 = vmatprep.subr.mxu0 0.0
    %1947 = vmatpush1.msra.mxu0 0.0
    %1948 = vmatprep.subr.mxu0 0.0
    %1949 = vmatpush1.msra.mxu0 0.0
    %1950 = vmatprep.subr.mxu0 0.0
    %1951 = vmatpush1.msra.mxu0 0.0
    %1952 = vmatprep.subr.mxu0 0.0
    %1953 = vmatpush1.msra.mxu0 0.0
    %1954 = vmatprep.subr.mxu0 0.0
    %1955 = vmatpush1.msra.mxu0 0.0
    %1956 = vmatprep.subr.mxu0 0.0
    %1957 = vmatpush1.msra.mxu0 0.0
    %1958 = vmatprep.subr.mxu0 0.0
    %1959 = vmatpush1.msra.mxu0 0.0
    %1960 = vmatprep.subr.mxu0 0.0
    %1961 = vmatpush1.msra.mxu0 0.0
    %1962 = vmatprep.subr.mxu0 0.0
    %1963 = vmatpush1.msra.mxu0 0.0
    %1964 = vmatprep.subr.mxu0 0.0
    %1965 = vmatpush1.msra.mxu0 0.0
    %1966 = vmatprep.subr.mxu0 0.0
    %1967 = vmatpush1.msra.mxu0 0.0
    %1968 = vmatprep.mubr.f32.mxu0 0.0
    %1969 = vmatmul.mubr.f32.gmra.mrb[0].mxu0 %v1880
    %v1970 = vpop.f32.mrb[0].mxu0
    %v1971 = vadd.f32 %v1902, %v1970
    %v1972 = vpop.f32.mrb[0].mxu0
    %1973 = vdwg.mxu0
    %vm1974 = vcmask 64512
    %1975 = vst.msk [vmem:[#allocation5] sm:$0xff] %vm1974, %v1971
    // Predicated region
    $region26: #{tpu_custom_call.1} parent=1 // pred_check
      _
    $region27: #{tpu_custom_call.1} parent=1 // pred_check_branch
      %1977 = sbr.rel (0) target = $region29
    $region28: #{tpu_custom_call.1} parent=1 // pred_region
      %s1979 = ssub.s32 128, 32
      %1980 = vsyncadd [#allocation4], %s1979
      %s1981 = sshll.u32 [#allocation5], 4
      %s1982 = int_to_ptr.vmem [resolvable:$true] %s1981
      %1987 = dma.vmem_to_hbm [thread:$0]  %s1982, 32, %s5, [#allocation4], 32, 32, 2
    $region29: #{tpu_custom_call.1} parent=1 // pred_fallthru
      _
    // Predicated region
    $region30: #{tpu_custom_call.1} parent=1 // pred_check
      _
    $region31: #{tpu_custom_call.1} parent=1 // pred_check_branch
      %1989 = sbr.rel (0) target = $region33
    $region32: #{tpu_custom_call.1} parent=1 // pred_region
      %1990 = dma.done [#allocation4], 128
    $region33: #{tpu_custom_call.1} parent=1 // pred_fallthru
      _
    %1991 = vsyncpa [#allocation3], 1
    %1992 = vsyncpa [#allocation4], 1

</llo_original>
